<compile_context>
chip_gen: v5e
topology: v5e:2x2
jax: 0.10.0
libtpu: 0.0.40
codegen_flags: <defaults>
</compile_context>

<pallas_src>
import functools

import jax
import jax.numpy as jnp
import numpy as np
from jax.experimental import pallas as pl
from jax.experimental.pallas import tpu as pltpu


# --------------------------- host-side weight prep ---------------------------

def _conv_matmul_bank(w, in_width, out_width):
    """Re-express a VALID KxK conv as K matmuls over row-shifted input windows.

    w: (C_out, C_in, K, K).  Returns (K, C_in*in_width, C_out*out_width) with
        bank[i, ic*in_width + c, oc*out_width + q] = w[oc, ic, i, c - q]  (0 <= c-q < K)
    """
    c_out, c_in, k, _ = w.shape
    eye = np.stack([np.eye(in_width, out_width, k=-j, dtype=np.float32)
                    for j in range(k)], axis=0)                     # (K, in_w, out_w)
    bank = np.einsum("ouij,jcq->iucoq", w.astype(np.float32), eye)
    return np.ascontiguousarray(
        bank.reshape(k, c_in * in_width, c_out * out_width), dtype=np.float32)


def _pool_col_selectors(channels, w_in):
    """0/1 matrices picking even/odd columns within each channel block (lane axis)."""
    w_out = w_in // 2
    even = np.zeros((channels * w_in, channels * w_out), np.float32)
    odd = np.zeros_like(even)
    for c in range(channels):
        for q in range(w_out):
            even[c * w_in + 2 * q, c * w_out + q] = 1.0
            odd[c * w_in + 2 * q + 1, c * w_out + q] = 1.0
    return np.stack([even, odd], axis=0)                            # (2, C*w_in, C*w_out)


_CONST_ORDER = ("cm1", "pw1", "cm2", "pw2", "fw1", "fw2", "fw3", "bias")


def prepare_constants(params):
    """One-time transform of PyTorch-layout params into MXU-friendly matrices."""
    w1 = np.asarray(params["conv1_w"], np.float32)        # (6, 1, 5, 5)
    b1 = np.asarray(params["conv1_b"], np.float32)
    w2 = np.asarray(params["conv2_w"], np.float32)        # (16, 6, 5, 5)
    b2 = np.asarray(params["conv2_b"], np.float32)
    f1w = np.asarray(params["fc1_w"], np.float32)         # (120, 256)
    f1b = np.asarray(params["fc1_b"], np.float32)
    f2w = np.asarray(params["fc2_w"], np.float32)         # (84, 120)
    f2b = np.asarray(params["fc2_b"], np.float32)
    f3w = np.asarray(params["fc3_w"], np.float32)         # (10, 84)
    f3b = np.asarray(params["fc3_b"], np.float32)

    # conv1: fuse the 5 taps along K -> a single (140, 144) matmul matrix.
    cm1 = _conv_matmul_bank(w1, 28, 24).reshape(5 * 28, 6 * 24)     # (140, 144)
    # conv2: keep 5 per-tap banks (inputs are cheap row-block slices in-kernel).
    cm2 = _conv_matmul_bank(w2, 12, 8)                              # (5, 72, 128)

    # fc3 weights/bias padded to 128 lanes -> lane-dense output stores.
    fw3 = np.zeros((84, 128), np.float32)
    fw3[:, :10] = f3w.T

    # all biases packed into one (5, 128) array (pooled-width conv biases).
    bias = np.zeros((5, 128), np.float32)
    bias[0, :72] = np.repeat(b1, 12)        # conv1 bias, pooled layout (ic*12 + q)
    bias[1, :64] = np.repeat(b2, 4)         # conv2 bias, pooled layout (oc*4 + q)
    bias[2, :120] = f1b
    bias[3, :84] = f2b
    bias[4, :10] = f3b

    consts = {
        "cm1": cm1,
        "pw1": _pool_col_selectors(6, 24),                          # (2, 144, 72)
        "cm2": cm2,
        "pw2": _pool_col_selectors(16, 8),                          # (2, 128, 64)
        # torch flattens (c, h, w); kernel's pooled layout is (h, c*4 + w) -> split by h.
        "fw1": np.ascontiguousarray(
            f1w.reshape(120, 16, 4, 4).transpose(2, 1, 3, 0).reshape(4, 64, 120)),
        "fw2": np.ascontiguousarray(f2w.T),                         # (120, 84)
        "fw3": fw3,                                                 # (84, 128)
        "bias": bias,                                               # (5, 128)
    }
    return {k: jnp.asarray(v, jnp.float32) for k, v in consts.items()}


# ------------------------------- fused kernel --------------------------------

def _lenet_kernel(bt, x_ref, cm1_ref, pw1_ref, cm2_ref, pw2_ref,
                  fw1_ref, fw2_ref, fw3_ref, bias_ref, out_ref):
    f32 = jnp.float32

    def mm(a, b):
        return jnp.dot(a, b, preferred_element_type=f32)

    cb1 = bias_ref[0:1, 0:72]      # conv1 bias (pooled width)
    cb2 = bias_ref[1:2, 0:64]      # conv2 bias (pooled width)
    fb1 = bias_ref[2:3, 0:120]
    fb2 = bias_ref[3:4, 0:84]
    fb3 = bias_ref[4:5, :]         # zero-padded to 128 lanes

    # ---- conv1: ONE K=140 matmul over the pre-built shifted slab -----------------
    # slab rows = (parity, pooled-row r, image b), lanes = tap*28 + col
    y1 = mm(x_ref[0], cm1_ref[...])                               # (24*bt, 144)

    # ---- pool1: row max = VPU max of even/odd halves, col max = 0/1 matmuls ------
    r1 = jnp.maximum(y1[:12 * bt, :], y1[12 * bt:, :])            # (12*bt, 144) rows (r,b)
    c1 = jnp.maximum(mm(r1, pw1_ref[0]), mm(r1, pw1_ref[1]))      # (12*bt, 72)
    p1 = jnp.maximum(c1 + cb1, 0.0)                               # relu(conv1+b) pooled

    # ---- conv2: 5 shifted row-block matmuls, tree-reduced ------------------------
    m = 8 * bt
    t0 = mm(p1[0 * bt:0 * bt + m, :], cm2_ref[0]) + mm(p1[1 * bt:1 * bt + m, :], cm2_ref[1])
    t1 = mm(p1[2 * bt:2 * bt + m, :], cm2_ref[2]) + mm(p1[3 * bt:3 * bt + m, :], cm2_ref[3])
    y2 = (t0 + t1) + mm(p1[4 * bt:4 * bt + m, :], cm2_ref[4])     # (8*bt, 128) rows (p,b)

    # ---- pool2: col-select first (commutes with max), then per-row-pair VPU max --
    c2 = jnp.maximum(mm(y2, pw2_ref[0]), mm(y2, pw2_ref[1]))      # (8*bt, 64)

    s_list = []
    for r2 in range(4):
        blk = jnp.maximum(c2[(2 * r2) * bt:(2 * r2 + 1) * bt, :],
                          c2[(2 * r2 + 1) * bt:(2 * r2 + 2) * bt, :])   # (bt, 64)
        s_list.append(jnp.maximum(blk + cb2, 0.0))                # relu(conv2+b) pooled

    # ---- fc1 (NCHW flatten folded into the pre-permuted, h-split fc1 weights) ----
    acc = (mm(s_list[0], fw1_ref[0]) + mm(s_list[1], fw1_ref[1])) + \
          (mm(s_list[2], fw1_ref[2]) + mm(s_list[3], fw1_ref[3]))
    h1 = jnp.maximum(acc + fb1, 0.0)                              # (bt, 120)

    # ---- fc2, fc3 (batched M=bt; fc3 padded to 128 lanes -> lane-dense store) ----
    h2 = jnp.maximum(mm(h1, fw2_ref[...]) + fb2, 0.0)             # (bt, 84)
    h3 = jnp.maximum(mm(h2, fw3_ref[...]) + fb3, 0.0)             # (bt, 128)

    out_ref[...] = h3


def make_forward(consts, batch, block_batch=8):
    """Build the jitted forward.  block_batch (Bt) must be a multiple of 8."""
    bt = int(block_batch)
    assert bt % 8 == 0 and bt > 0, bt
    bp = ((batch + bt - 1) // bt) * bt            # batch padded to a multiple of Bt
    n_tiles = bp // bt

    const_list = [consts[k] for k in _CONST_ORDER]

    def full_block(a):
        nd = a.ndim
        return pl.BlockSpec(a.shape, lambda t, _nd=nd: (0,) * _nd)

    flops_tile = 2 * (24 * bt * 140 * 144          # conv1
                      + 2 * 12 * bt * 144 * 72     # pool1 column selects
                      + 5 * 8 * bt * 72 * 128      # conv2
                      + 2 * 8 * bt * 128 * 64      # pool2 column selects
                      + 4 * bt * 64 * 120          # fc1
                      + bt * 120 * 84              # fc2
                      + bt * 84 * 128)             # fc3 (padded)
    bytes_const = sum(int(np.prod(a.shape)) * 4 for a in const_list)
    cost = pl.CostEstimate(
        flops=flops_tile * n_tiles,
        transcendentals=0,
        bytes_accessed=n_tiles * 24 * bt * 140 * 4 + bp * 128 * 4 + bytes_const)

    fused = pl.pallas_call(
        functools.partial(_lenet_kernel, bt),
        grid=(n_tiles,),
        in_specs=[pl.BlockSpec((1, 24 * bt, 140), lambda t: (t, 0, 0))]
        + [full_block(a) for a in const_list],
        out_specs=pl.BlockSpec((bt, 128), lambda t: (t, 0)),
        out_shape=jax.ShapeDtypeStruct((bp, 128), jnp.float32),
        compiler_params=pltpu.CompilerParams(
            dimension_semantics=("parallel",)),
        cost_estimate=cost,
    )

    # Input-row gather table for the shifted-window slab:
    #   slab[t, (par*12 + r)*bt + b', i*28 + c] = x[t*bt + b', 0, 2r + par + i, c]
    par = np.arange(2)[:, None, None]
    rr = np.arange(12)[None, :, None]
    ii = np.arange(5)[None, None, :]
    row_idx = jnp.asarray((2 * rr + par + ii).reshape(24, 5), jnp.int32)   # (24, 5)

    @jax.jit
    def forward(x_nchw):
        assert x_nchw.shape == (batch, 1, 28, 28), x_nchw.shape
        x = x_nchw.astype(jnp.float32)
        if bp != batch:
            x = jnp.pad(x, ((0, bp - batch), (0, 0), (0, 0), (0, 0)))
        xs = x[:, 0]                                        # (bp, 28, 28)
        g = xs[:, row_idx, :]                               # (bp, 24, 5, 28)
        g = g.reshape(n_tiles, bt, 24, 5 * 28)              # split batch, fuse (tap,col)
        slab = jnp.transpose(g, (0, 2, 1, 3)).reshape(n_tiles, 24 * bt, 140)
        out = fused(slab, *const_list)                      # (bp, 128) lane-dense
        return out[:batch, :10]

    return forward


# ------------------------------ parameters -----------------------------------

def init_params(key):
    ks = jax.random.split(key, 10)

    def u(k, shape, fan_in):
        bound = 1.0 / jnp.sqrt(jnp.float32(fan_in))
        return jax.random.uniform(k, shape, jnp.float32, -bound, bound)

    return {
        "conv1_w": u(ks[0], (6, 1, 5, 5), 1 * 5 * 5),
        "conv1_b": u(ks[1], (6,), 1 * 5 * 5),
        "conv2_w": u(ks[2], (16, 6, 5, 5), 6 * 5 * 5),
        "conv2_b": u(ks[3], (16,), 6 * 5 * 5),
        "fc1_w": u(ks[4], (120, 256), 256),
        "fc1_b": u(ks[5], (120,), 256),
        "fc2_w": u(ks[6], (84, 120), 120),
        "fc2_b": u(ks[7], (84,), 120),
        "fc3_w": u(ks[8], (10, 84), 84),
        "fc3_b": u(ks[9], (10,), 84),
    }


# pure-JAX reference of the PyTorch forward for a numerical sanity check
def forward_ref(params, x_nchw):
    dn = ("NCHW", "OIHW", "NCHW")
    y = jax.lax.conv_general_dilated(x_nchw, params["conv1_w"], (1, 1), "VALID",
                                     dimension_numbers=dn)
    y = jax.nn.relu(y + params["conv1_b"][None, :, None, None])
    y = jax.lax.reduce_window(y, -jnp.inf, jax.lax.max, (1, 1, 2, 2),
                              (1, 1, 2, 2), "VALID")
    y = jax.lax.conv_general_dilated(y, params["conv2_w"], (1, 1), "VALID",
                                     dimension_numbers=dn)
    y = jax.nn.relu(y + params["conv2_b"][None, :, None, None])
    y = jax.lax.reduce_window(y, -jnp.inf, jax.lax.max, (1, 1, 2, 2),
                              (1, 1, 2, 2), "VALID")
    y = y.reshape(y.shape[0], -1)
    y = jax.nn.relu(y @ params["fc1_w"].T + params["fc1_b"])
    y = jax.nn.relu(y @ params["fc2_w"].T + params["fc2_b"])
    y = jax.nn.relu(y @ params["fc3_w"].T + params["fc3_b"])
    return y


if __name__ == "__main__":
    key = jax.random.PRNGKey(0)
    k_params, k_x = jax.random.split(key)
    params = init_params(k_params)

    B = 16                 # demo: 2 batch tiles of Bt=8 -> grid=(2,)
    x = jax.random.normal(k_x, (B, 1, 28, 28), jnp.float32)

    consts = prepare_constants(params)        # one-time weight prep, outside jit
    forward = make_forward(consts, B, block_batch=8)

    out = jax.block_until_ready(forward(x))
    ref = jax.block_until_ready(forward_ref(params, x))

    assert out.shape == (B, 10), out.shape
    max_err = float(jnp.max(jnp.abs(out - ref)))
    assert jnp.allclose(out, ref, atol=1e-3, rtol=1e-3), max_err

    print("KERNEL_OK")
</pallas_src>

<mosaic_0001>
module attributes {stable_mosaic.version = 11 : i64} {
  func.func @_lenet_kernel(%arg0: i32, %arg1: memref<1x192x140xf32, #tpu.memory_space<vmem>>, %arg2: memref<140x144xf32, #tpu.memory_space<vmem>>, %arg3: memref<2x144x72xf32, #tpu.memory_space<vmem>>, %arg4: memref<5x72x128xf32, #tpu.memory_space<vmem>>, %arg5: memref<2x128x64xf32, #tpu.memory_space<vmem>>, %arg6: memref<4x64x120xf32, #tpu.memory_space<vmem>>, %arg7: memref<120x84xf32, #tpu.memory_space<vmem>>, %arg8: memref<84x128xf32, #tpu.memory_space<vmem>>, %arg9: memref<5x128xf32, #tpu.memory_space<vmem>>, %arg10: memref<8x128xf32, #tpu.memory_space<vmem>>) attributes {dimension_semantics = [#tpu.dimension_semantics<parallel>], iteration_bounds = array<i64: 2>, scalar_prefetch = 0 : i64, scratch_operands = 0 : i64, tpu.core_type = #tpu.core_type<tc>, window_params = [{transform_indices = @transform_0, window_bounds = array<i64: 1, 192, 140>}, {pipeline_mode = #tpu.pipeline_mode<synchronous>, transform_indices = @transform_1, window_bounds = array<i64: 140, 144>}, {pipeline_mode = #tpu.pipeline_mode<synchronous>, transform_indices = @transform_2, window_bounds = array<i64: 2, 144, 72>}, {pipeline_mode = #tpu.pipeline_mode<synchronous>, transform_indices = @transform_3, window_bounds = array<i64: 5, 72, 128>}, {pipeline_mode = #tpu.pipeline_mode<synchronous>, transform_indices = @transform_4, window_bounds = array<i64: 2, 128, 64>}, {pipeline_mode = #tpu.pipeline_mode<synchronous>, transform_indices = @transform_5, window_bounds = array<i64: 4, 64, 120>}, {pipeline_mode = #tpu.pipeline_mode<synchronous>, transform_indices = @transform_6, window_bounds = array<i64: 120, 84>}, {pipeline_mode = #tpu.pipeline_mode<synchronous>, transform_indices = @transform_7, window_bounds = array<i64: 84, 128>}, {pipeline_mode = #tpu.pipeline_mode<synchronous>, transform_indices = @transform_8, window_bounds = array<i64: 5, 128>}, {transform_indices = @transform_9, window_bounds = array<i64: 8, 128>}]} {
    %c0 = arith.constant 0 : index
    %c0_0 = arith.constant 0 : index
    %0 = vector.load %arg9[%c0, %c0_0] : memref<5x128xf32, #tpu.memory_space<vmem>>, vector<1x72xf32>
    %c1 = arith.constant 1 : index
    %c0_1 = arith.constant 0 : index
    %1 = vector.load %arg9[%c1, %c0_1] : memref<5x128xf32, #tpu.memory_space<vmem>>, vector<1x64xf32>
    %c2 = arith.constant 2 : index
    %c0_2 = arith.constant 0 : index
    %2 = vector.load %arg9[%c2, %c0_2] : memref<5x128xf32, #tpu.memory_space<vmem>>, vector<1x120xf32>
    %c3 = arith.constant 3 : index
    %c0_3 = arith.constant 0 : index
    %3 = vector.load %arg9[%c3, %c0_3] : memref<5x128xf32, #tpu.memory_space<vmem>>, vector<1x84xf32>
    %c4 = arith.constant 4 : index
    %c0_4 = arith.constant 0 : index
    %4 = vector.load %arg9[%c4, %c0_4] : memref<5x128xf32, #tpu.memory_space<vmem>>, vector<1x128xf32>
    %c0_5 = arith.constant 0 : index
    %c0_6 = arith.constant 0 : index
    %c0_7 = arith.constant 0 : index
    %5 = vector.load %arg1[%c0_5, %c0_6, %c0_7] : memref<1x192x140xf32, #tpu.memory_space<vmem>>, vector<1x192x140xf32>
    %6 = vector.shape_cast %5 : vector<1x192x140xf32> to vector<192x140xf32>
    %c0_8 = arith.constant 0 : index
    %c0_9 = arith.constant 0 : index
    %7 = vector.load %arg2[%c0_8, %c0_9] : memref<140x144xf32, #tpu.memory_space<vmem>>, vector<140x144xf32>
    %cst = arith.constant dense<0.000000e+00> : vector<192x144xf32>
    %8 = tpu.matmul %6, %7, %cst {dimension_numbers = #tpu.dot_dimension_numbers<[1], [0], [0], [1], [0, 0, 1, 1], [], []>} : vector<192x140xf32>, vector<140x144xf32>, vector<192x144xf32> -> vector<192x144xf32>
    %9 = vector.extract_strided_slice %8 {offsets = [0, 0], sizes = [96, 144], strides = [1, 1]} : vector<192x144xf32> to vector<96x144xf32>
    %10 = vector.extract_strided_slice %8 {offsets = [96, 0], sizes = [96, 144], strides = [1, 1]} : vector<192x144xf32> to vector<96x144xf32>
    %11 = arith.maximumf %9, %10 : vector<96x144xf32>
    %c0_10 = arith.constant 0 : index
    %c0_11 = arith.constant 0 : index
    %c0_12 = arith.constant 0 : index
    %12 = vector.load %arg3[%c0_10, %c0_11, %c0_12] : memref<2x144x72xf32, #tpu.memory_space<vmem>>, vector<1x144x72xf32>
    %13 = vector.shape_cast %12 : vector<1x144x72xf32> to vector<144x72xf32>
    %cst_13 = arith.constant dense<0.000000e+00> : vector<96x72xf32>
    %14 = tpu.matmul %11, %13, %cst_13 {dimension_numbers = #tpu.dot_dimension_numbers<[1], [0], [0], [1], [0, 0, 1, 1], [], []>} : vector<96x144xf32>, vector<144x72xf32>, vector<96x72xf32> -> vector<96x72xf32>
    %c1_14 = arith.constant 1 : index
    %c0_15 = arith.constant 0 : index
    %c0_16 = arith.constant 0 : index
    %15 = vector.load %arg3[%c1_14, %c0_15, %c0_16] : memref<2x144x72xf32, #tpu.memory_space<vmem>>, vector<1x144x72xf32>
    %16 = vector.shape_cast %15 : vector<1x144x72xf32> to vector<144x72xf32>
    %cst_17 = arith.constant dense<0.000000e+00> : vector<96x72xf32>
    %17 = tpu.matmul %11, %16, %cst_17 {dimension_numbers = #tpu.dot_dimension_numbers<[1], [0], [0], [1], [0, 0, 1, 1], [], []>} : vector<96x144xf32>, vector<144x72xf32>, vector<96x72xf32> -> vector<96x72xf32>
    %18 = arith.maximumf %14, %17 : vector<96x72xf32>
    %19 = vector.broadcast %0 : vector<1x72xf32> to vector<96x72xf32>
    %20 = arith.addf %18, %19 : vector<96x72xf32>
    %cst_18 = arith.constant 0.000000e+00 : f32
    %21 = vector.broadcast %cst_18 : f32 to vector<96x72xf32>
    %22 = arith.maximumf %20, %21 : vector<96x72xf32>
    %23 = vector.extract_strided_slice %22 {offsets = [0, 0], sizes = [64, 72], strides = [1, 1]} : vector<96x72xf32> to vector<64x72xf32>
    %c0_19 = arith.constant 0 : index
    %c0_20 = arith.constant 0 : index
    %c0_21 = arith.constant 0 : index
    %24 = vector.load %arg4[%c0_19, %c0_20, %c0_21] : memref<5x72x128xf32, #tpu.memory_space<vmem>>, vector<1x72x128xf32>
    %25 = vector.shape_cast %24 : vector<1x72x128xf32> to vector<72x128xf32>
    %cst_22 = arith.constant dense<0.000000e+00> : vector<64x128xf32>
    %26 = tpu.matmul %23, %25, %cst_22 {dimension_numbers = #tpu.dot_dimension_numbers<[1], [0], [0], [1], [0, 0, 1, 1], [], []>} : vector<64x72xf32>, vector<72x128xf32>, vector<64x128xf32> -> vector<64x128xf32>
    %27 = vector.extract_strided_slice %22 {offsets = [8, 0], sizes = [64, 72], strides = [1, 1]} : vector<96x72xf32> to vector<64x72xf32>
    %c1_23 = arith.constant 1 : index
    %c0_24 = arith.constant 0 : index
    %c0_25 = arith.constant 0 : index
    %28 = vector.load %arg4[%c1_23, %c0_24, %c0_25] : memref<5x72x128xf32, #tpu.memory_space<vmem>>, vector<1x72x128xf32>
    %29 = vector.shape_cast %28 : vector<1x72x128xf32> to vector<72x128xf32>
    %cst_26 = arith.constant dense<0.000000e+00> : vector<64x128xf32>
    %30 = tpu.matmul %27, %29, %cst_26 {dimension_numbers = #tpu.dot_dimension_numbers<[1], [0], [0], [1], [0, 0, 1, 1], [], []>} : vector<64x72xf32>, vector<72x128xf32>, vector<64x128xf32> -> vector<64x128xf32>
    %31 = arith.addf %26, %30 : vector<64x128xf32>
    %32 = vector.extract_strided_slice %22 {offsets = [16, 0], sizes = [64, 72], strides = [1, 1]} : vector<96x72xf32> to vector<64x72xf32>
    %c2_27 = arith.constant 2 : index
    %c0_28 = arith.constant 0 : index
    %c0_29 = arith.constant 0 : index
    %33 = vector.load %arg4[%c2_27, %c0_28, %c0_29] : memref<5x72x128xf32, #tpu.memory_space<vmem>>, vector<1x72x128xf32>
    %34 = vector.shape_cast %33 : vector<1x72x128xf32> to vector<72x128xf32>
    %cst_30 = arith.constant dense<0.000000e+00> : vector<64x128xf32>
    %35 = tpu.matmul %32, %34, %cst_30 {dimension_numbers = #tpu.dot_dimension_numbers<[1], [0], [0], [1], [0, 0, 1, 1], [], []>} : vector<64x72xf32>, vector<72x128xf32>, vector<64x128xf32> -> vector<64x128xf32>
    %36 = vector.extract_strided_slice %22 {offsets = [24, 0], sizes = [64, 72], strides = [1, 1]} : vector<96x72xf32> to vector<64x72xf32>
    %c3_31 = arith.constant 3 : index
    %c0_32 = arith.constant 0 : index
    %c0_33 = arith.constant 0 : index
    %37 = vector.load %arg4[%c3_31, %c0_32, %c0_33] : memref<5x72x128xf32, #tpu.memory_space<vmem>>, vector<1x72x128xf32>
    %38 = vector.shape_cast %37 : vector<1x72x128xf32> to vector<72x128xf32>
    %cst_34 = arith.constant dense<0.000000e+00> : vector<64x128xf32>
    %39 = tpu.matmul %36, %38, %cst_34 {dimension_numbers = #tpu.dot_dimension_numbers<[1], [0], [0], [1], [0, 0, 1, 1], [], []>} : vector<64x72xf32>, vector<72x128xf32>, vector<64x128xf32> -> vector<64x128xf32>
    %40 = arith.addf %35, %39 : vector<64x128xf32>
    %41 = arith.addf %31, %40 : vector<64x128xf32>
    %42 = vector.extract_strided_slice %22 {offsets = [32, 0], sizes = [64, 72], strides = [1, 1]} : vector<96x72xf32> to vector<64x72xf32>
    %c4_35 = arith.constant 4 : index
    %c0_36 = arith.constant 0 : index
    %c0_37 = arith.constant 0 : index
    %43 = vector.load %arg4[%c4_35, %c0_36, %c0_37] : memref<5x72x128xf32, #tpu.memory_space<vmem>>, vector<1x72x128xf32>
    %44 = vector.shape_cast %43 : vector<1x72x128xf32> to vector<72x128xf32>
    %cst_38 = arith.constant dense<0.000000e+00> : vector<64x128xf32>
    %45 = tpu.matmul %42, %44, %cst_38 {dimension_numbers = #tpu.dot_dimension_numbers<[1], [0], [0], [1], [0, 0, 1, 1], [], []>} : vector<64x72xf32>, vector<72x128xf32>, vector<64x128xf32> -> vector<64x128xf32>
    %46 = arith.addf %41, %45 : vector<64x128xf32>
    %c0_39 = arith.constant 0 : index
    %c0_40 = arith.constant 0 : index
    %c0_41 = arith.constant 0 : index
    %47 = vector.load %arg5[%c0_39, %c0_40, %c0_41] : memref<2x128x64xf32, #tpu.memory_space<vmem>>, vector<1x128x64xf32>
    %48 = vector.shape_cast %47 : vector<1x128x64xf32> to vector<128x64xf32>
    %cst_42 = arith.constant dense<0.000000e+00> : vector<64x64xf32>
    %49 = tpu.matmul %46, %48, %cst_42 {dimension_numbers = #tpu.dot_dimension_numbers<[1], [0], [0], [1], [0, 0, 1, 1], [], []>} : vector<64x128xf32>, vector<128x64xf32>, vector<64x64xf32> -> vector<64x64xf32>
    %c1_43 = arith.constant 1 : index
    %c0_44 = arith.constant 0 : index
    %c0_45 = arith.constant 0 : index
    %50 = vector.load %arg5[%c1_43, %c0_44, %c0_45] : memref<2x128x64xf32, #tpu.memory_space<vmem>>, vector<1x128x64xf32>
    %51 = vector.shape_cast %50 : vector<1x128x64xf32> to vector<128x64xf32>
    %cst_46 = arith.constant dense<0.000000e+00> : vector<64x64xf32>
    %52 = tpu.matmul %46, %51, %cst_46 {dimension_numbers = #tpu.dot_dimension_numbers<[1], [0], [0], [1], [0, 0, 1, 1], [], []>} : vector<64x128xf32>, vector<128x64xf32>, vector<64x64xf32> -> vector<64x64xf32>
    %53 = arith.maximumf %49, %52 : vector<64x64xf32>
    %54 = vector.extract_strided_slice %53 {offsets = [0, 0], sizes = [8, 64], strides = [1, 1]} : vector<64x64xf32> to vector<8x64xf32>
    %55 = vector.extract_strided_slice %53 {offsets = [8, 0], sizes = [8, 64], strides = [1, 1]} : vector<64x64xf32> to vector<8x64xf32>
    %56 = arith.maximumf %54, %55 : vector<8x64xf32>
    %57 = vector.broadcast %1 : vector<1x64xf32> to vector<8x64xf32>
    %58 = arith.addf %56, %57 : vector<8x64xf32>
    %cst_47 = arith.constant 0.000000e+00 : f32
    %59 = vector.broadcast %cst_47 : f32 to vector<8x64xf32>
    %60 = arith.maximumf %58, %59 : vector<8x64xf32>
    %61 = vector.extract_strided_slice %53 {offsets = [16, 0], sizes = [8, 64], strides = [1, 1]} : vector<64x64xf32> to vector<8x64xf32>
    %62 = vector.extract_strided_slice %53 {offsets = [24, 0], sizes = [8, 64], strides = [1, 1]} : vector<64x64xf32> to vector<8x64xf32>
    %63 = arith.maximumf %61, %62 : vector<8x64xf32>
    %64 = vector.broadcast %1 : vector<1x64xf32> to vector<8x64xf32>
    %65 = arith.addf %63, %64 : vector<8x64xf32>
    %cst_48 = arith.constant 0.000000e+00 : f32
    %66 = vector.broadcast %cst_48 : f32 to vector<8x64xf32>
    %67 = arith.maximumf %65, %66 : vector<8x64xf32>
    %68 = vector.extract_strided_slice %53 {offsets = [32, 0], sizes = [8, 64], strides = [1, 1]} : vector<64x64xf32> to vector<8x64xf32>
    %69 = vector.extract_strided_slice %53 {offsets = [40, 0], sizes = [8, 64], strides = [1, 1]} : vector<64x64xf32> to vector<8x64xf32>
    %70 = arith.maximumf %68, %69 : vector<8x64xf32>
    %71 = vector.broadcast %1 : vector<1x64xf32> to vector<8x64xf32>
    %72 = arith.addf %70, %71 : vector<8x64xf32>
    %cst_49 = arith.constant 0.000000e+00 : f32
    %73 = vector.broadcast %cst_49 : f32 to vector<8x64xf32>
    %74 = arith.maximumf %72, %73 : vector<8x64xf32>
    %75 = vector.extract_strided_slice %53 {offsets = [48, 0], sizes = [8, 64], strides = [1, 1]} : vector<64x64xf32> to vector<8x64xf32>
    %76 = vector.extract_strided_slice %53 {offsets = [56, 0], sizes = [8, 64], strides = [1, 1]} : vector<64x64xf32> to vector<8x64xf32>
    %77 = arith.maximumf %75, %76 : vector<8x64xf32>
    %78 = vector.broadcast %1 : vector<1x64xf32> to vector<8x64xf32>
    %79 = arith.addf %77, %78 : vector<8x64xf32>
    %cst_50 = arith.constant 0.000000e+00 : f32
    %80 = vector.broadcast %cst_50 : f32 to vector<8x64xf32>
    %81 = arith.maximumf %79, %80 : vector<8x64xf32>
    %c0_51 = arith.constant 0 : index
    %c0_52 = arith.constant 0 : index
    %c0_53 = arith.constant 0 : index
    %82 = vector.load %arg6[%c0_51, %c0_52, %c0_53] : memref<4x64x120xf32, #tpu.memory_space<vmem>>, vector<1x64x120xf32>
    %83 = vector.shape_cast %82 : vector<1x64x120xf32> to vector<64x120xf32>
    %cst_54 = arith.constant dense<0.000000e+00> : vector<8x120xf32>
    %84 = tpu.matmul %60, %83, %cst_54 {dimension_numbers = #tpu.dot_dimension_numbers<[1], [0], [0], [1], [0, 0, 1, 1], [], []>} : vector<8x64xf32>, vector<64x120xf32>, vector<8x120xf32> -> vector<8x120xf32>
    %c1_55 = arith.constant 1 : index
    %c0_56 = arith.constant 0 : index
    %c0_57 = arith.constant 0 : index
    %85 = vector.load %arg6[%c1_55, %c0_56, %c0_57] : memref<4x64x120xf32, #tpu.memory_space<vmem>>, vector<1x64x120xf32>
    %86 = vector.shape_cast %85 : vector<1x64x120xf32> to vector<64x120xf32>
    %cst_58 = arith.constant dense<0.000000e+00> : vector<8x120xf32>
    %87 = tpu.matmul %67, %86, %cst_58 {dimension_numbers = #tpu.dot_dimension_numbers<[1], [0], [0], [1], [0, 0, 1, 1], [], []>} : vector<8x64xf32>, vector<64x120xf32>, vector<8x120xf32> -> vector<8x120xf32>
    %88 = arith.addf %84, %87 : vector<8x120xf32>
    %c2_59 = arith.constant 2 : index
    %c0_60 = arith.constant 0 : index
    %c0_61 = arith.constant 0 : index
    %89 = vector.load %arg6[%c2_59, %c0_60, %c0_61] : memref<4x64x120xf32, #tpu.memory_space<vmem>>, vector<1x64x120xf32>
    %90 = vector.shape_cast %89 : vector<1x64x120xf32> to vector<64x120xf32>
    %cst_62 = arith.constant dense<0.000000e+00> : vector<8x120xf32>
    %91 = tpu.matmul %74, %90, %cst_62 {dimension_numbers = #tpu.dot_dimension_numbers<[1], [0], [0], [1], [0, 0, 1, 1], [], []>} : vector<8x64xf32>, vector<64x120xf32>, vector<8x120xf32> -> vector<8x120xf32>
    %c3_63 = arith.constant 3 : index
    %c0_64 = arith.constant 0 : index
    %c0_65 = arith.constant 0 : index
    %92 = vector.load %arg6[%c3_63, %c0_64, %c0_65] : memref<4x64x120xf32, #tpu.memory_space<vmem>>, vector<1x64x120xf32>
    %93 = vector.shape_cast %92 : vector<1x64x120xf32> to vector<64x120xf32>
    %cst_66 = arith.constant dense<0.000000e+00> : vector<8x120xf32>
    %94 = tpu.matmul %81, %93, %cst_66 {dimension_numbers = #tpu.dot_dimension_numbers<[1], [0], [0], [1], [0, 0, 1, 1], [], []>} : vector<8x64xf32>, vector<64x120xf32>, vector<8x120xf32> -> vector<8x120xf32>
    %95 = arith.addf %91, %94 : vector<8x120xf32>
    %96 = arith.addf %88, %95 : vector<8x120xf32>
    %97 = vector.broadcast %2 : vector<1x120xf32> to vector<8x120xf32>
    %98 = arith.addf %96, %97 : vector<8x120xf32>
    %cst_67 = arith.constant 0.000000e+00 : f32
    %99 = vector.broadcast %cst_67 : f32 to vector<8x120xf32>
    %100 = arith.maximumf %98, %99 : vector<8x120xf32>
    %c0_68 = arith.constant 0 : index
    %c0_69 = arith.constant 0 : index
    %101 = vector.load %arg7[%c0_68, %c0_69] : memref<120x84xf32, #tpu.memory_space<vmem>>, vector<120x84xf32>
    %cst_70 = arith.constant dense<0.000000e+00> : vector<8x84xf32>
    %102 = tpu.matmul %100, %101, %cst_70 {dimension_numbers = #tpu.dot_dimension_numbers<[1], [0], [0], [1], [0, 0, 1, 1], [], []>} : vector<8x120xf32>, vector<120x84xf32>, vector<8x84xf32> -> vector<8x84xf32>
    %103 = vector.broadcast %3 : vector<1x84xf32> to vector<8x84xf32>
    %104 = arith.addf %102, %103 : vector<8x84xf32>
    %cst_71 = arith.constant 0.000000e+00 : f32
    %105 = vector.broadcast %cst_71 : f32 to vector<8x84xf32>
    %106 = arith.maximumf %104, %105 : vector<8x84xf32>
    %c0_72 = arith.constant 0 : index
    %c0_73 = arith.constant 0 : index
    %107 = vector.load %arg8[%c0_72, %c0_73] : memref<84x128xf32, #tpu.memory_space<vmem>>, vector<84x128xf32>
    %cst_74 = arith.constant dense<0.000000e+00> : vector<8x128xf32>
    %108 = tpu.matmul %106, %107, %cst_74 {dimension_numbers = #tpu.dot_dimension_numbers<[1], [0], [0], [1], [0, 0, 1, 1], [], []>} : vector<8x84xf32>, vector<84x128xf32>, vector<8x128xf32> -> vector<8x128xf32>
    %109 = vector.broadcast %4 : vector<1x128xf32> to vector<8x128xf32>
    %110 = arith.addf %108, %109 : vector<8x128xf32>
    %cst_75 = arith.constant 0.000000e+00 : f32
    %111 = vector.broadcast %cst_75 : f32 to vector<8x128xf32>
    %112 = arith.maximumf %110, %111 : vector<8x128xf32>
    %c0_76 = arith.constant 0 : index
    %c0_77 = arith.constant 0 : index
    %113 = vector.load %arg10[%c0_76, %c0_77] : memref<8x128xf32, #tpu.memory_space<vmem>>, vector<8x128xf32>
    tpu.vector_store %arg10[%c0_76, %c0_77], %112 {strides = array<i32>} : memref<8x128xf32, #tpu.memory_space<vmem>>, vector<8x128xf32>,
    return
  }
  func.func @transform_0(%arg0: i32) -> (i32, i32, i32) {
    %c0_i32 = arith.constant 0 : i32
    %c0_i32_0 = arith.constant 0 : i32
    %c0_i32_1 = arith.constant 0 : i32
    return %arg0, %c0_i32, %c0_i32_0 : i32, i32, i32
  }
  func.func @transform_1(%arg0: i32) -> (i32, i32) {
    %c0_i32 = arith.constant 0 : i32
    %c0_i32_0 = arith.constant 0 : i32
    %c0_i32_1 = arith.constant 0 : i32
    return %c0_i32, %c0_i32_0 : i32, i32
  }
  func.func @transform_2(%arg0: i32) -> (i32, i32, i32) {
    %c0_i32 = arith.constant 0 : i32
    %c0_i32_0 = arith.constant 0 : i32
    %c0_i32_1 = arith.constant 0 : i32
    %c0_i32_2 = arith.constant 0 : i32
    return %c0_i32, %c0_i32_0, %c0_i32_1 : i32, i32, i32
  }
  func.func @transform_3(%arg0: i32) -> (i32, i32, i32) {
    %c0_i32 = arith.constant 0 : i32
    %c0_i32_0 = arith.constant 0 : i32
    %c0_i32_1 = arith.constant 0 : i32
    %c0_i32_2 = arith.constant 0 : i32
    return %c0_i32, %c0_i32_0, %c0_i32_1 : i32, i32, i32
  }
  func.func @transform_4(%arg0: i32) -> (i32, i32, i32) {
    %c0_i32 = arith.constant 0 : i32
    %c0_i32_0 = arith.constant 0 : i32
    %c0_i32_1 = arith.constant 0 : i32
    %c0_i32_2 = arith.constant 0 : i32
    return %c0_i32, %c0_i32_0, %c0_i32_1 : i32, i32, i32
  }
  func.func @transform_5(%arg0: i32) -> (i32, i32, i32) {
    %c0_i32 = arith.constant 0 : i32
    %c0_i32_0 = arith.constant 0 : i32
    %c0_i32_1 = arith.constant 0 : i32
    %c0_i32_2 = arith.constant 0 : i32
    return %c0_i32, %c0_i32_0, %c0_i32_1 : i32, i32, i32
  }
  func.func @transform_6(%arg0: i32) -> (i32, i32) {
    %c0_i32 = arith.constant 0 : i32
    %c0_i32_0 = arith.constant 0 : i32
    %c0_i32_1 = arith.constant 0 : i32
    return %c0_i32, %c0_i32_0 : i32, i32
  }
  func.func @transform_7(%arg0: i32) -> (i32, i32) {
    %c0_i32 = arith.constant 0 : i32
    %c0_i32_0 = arith.constant 0 : i32
    %c0_i32_1 = arith.constant 0 : i32
    return %c0_i32, %c0_i32_0 : i32, i32
  }
  func.func @transform_8(%arg0: i32) -> (i32, i32) {
    %c0_i32 = arith.constant 0 : i32
    %c0_i32_0 = arith.constant 0 : i32
    %c0_i32_1 = arith.constant 0 : i32
    return %c0_i32, %c0_i32_0 : i32, i32
  }
  func.func @transform_9(%arg0: i32) -> (i32, i32) {
    %c0_i32 = arith.constant 0 : i32
    %c0_i32_0 = arith.constant 0 : i32
    return %arg0, %c0_i32 : i32, i32
  }
}

</mosaic_0001>

<llo_original>
// kernel: forward.1
$region0: #{forward.1}
  #allocation0 [shape = 'u32[]', space=smem, size = 0x4, offset = 0x4, fixed_abs, tag = 'smem constant byte address 0x4 - core index']
  #allocation1 [shape = 'u32[72,128]{1,0:T(1,128)}', space=vmem, size = 0x9000, scoped, tag = 'internal scratch']
  %s0 = inlined_call_operand.vmem [shape: f32[2,192,140], index: 0, kind: input, shape index: {}]
  %s1 = inlined_call_operand.vmem [shape: f32[140,144], index: 1, kind: input, shape index: {}]
  %s2 = inlined_call_operand.vmem [shape: f32[2,144,72], index: 2, kind: input, shape index: {}]
  %s3 = inlined_call_operand.vmem [shape: f32[5,72,128], index: 3, kind: input, shape index: {}]
  %s4 = inlined_call_operand.vmem [shape: f32[2,128,64], index: 4, kind: input, shape index: {}]
  %s5 = inlined_call_operand.vmem [shape: f32[4,64,120], index: 5, kind: input, shape index: {}]
  %s6 = inlined_call_operand.vmem [shape: f32[120,84], index: 6, kind: input, shape index: {}]
  %s7 = inlined_call_operand.vmem [shape: f32[84,128], index: 7, kind: input, shape index: {}]
  %s8 = inlined_call_operand.vmem [shape: f32[5,128], index: 8, kind: input, shape index: {}]
  %s9 = inlined_call_operand.hbm [shape: f32[16,128], index: 9, kind: output, shape index: {}]
  %s10 = sld [smem:[#allocation0]]
  $region69: #{forward.1} parent=0
    _
  %s12 = ssub.s32 1, %s10
  %s13 = scalar_select 0, %s12, %s10
  $region1: #{forward.1} parent=0
    #allocation2 [shape = 'u8[8192]{0}', space=vmem, size = 0x2000, scoped, tag = 'output window, operand 0']
    #allocation3 [shape = 's32[2]{0}', space=sflag, size = 0x8, scoped, tag = 'scoped memory for forward.1']
    %14 = vsyncpa [#allocation3], 0
    %s15 = scalar_lea.sflag [#allocation3], 1
    %16 = vsyncpa %s15, 0
    loop: start=0, step=1, limit=4
    $region2: #{forward.1} parent=1 // loop_pre_header
      _
    $region3: #{forward.1} parent=1 // loop_header
      %s18 = sphi 0, %s22
      %p19 = scmp.ge.s32.totalorder %s18, 4
      %s28 = sphi 0, %s30
      %s31 = sphi 0, %s28
      %s32 = sphi 0, %s31
      %s48 = sphi 0, %s32
      %s52 = sphi 0, %s52
      %s54 = sphi 0, %s52
      %s55 = sphi 0, %s54
      %s69 = sphi 0, %s55
      %s73 = sphi 0, %s73
      %s75 = sphi 0, %s73
      %s76 = sphi 0, %s75
      %s90 = sphi 0, %s76
      %s94 = sphi 0, %s94
      %s96 = sphi 0, %s94
      %s97 = sphi 0, %s96
      %s111 = sphi 0, %s97
      %s115 = sphi 0, %s115
      %s117 = sphi 0, %s115
      %s118 = sphi 0, %s117
      %s132 = sphi 0, %s118
      %s136 = sphi 0, %s136
      %s138 = sphi 0, %s136
      %s139 = sphi 0, %s138
      %s153 = sphi 0, %s139
      %s157 = sphi 0, %s157
      %s159 = sphi 0, %s157
      %s160 = sphi 0, %s159
      %s174 = sphi 0, %s160
      %s178 = sphi 0, %s178
      %s180 = sphi 0, %s178
      %s181 = sphi 0, %s180
      %s195 = sphi 0, %s181
      %s199 = sphi 0, %s199
      %s201 = sphi 0, %s199
      %s202 = sphi 0, %s201
      %s216 = sphi 0, %s202
      %s222 = sphi 0, %s224
      %s225 = sphi 0, %s222
      %s226 = sphi 0, %s225
      %s242 = sphi 0, %s226
    $region4: #{forward.1} parent=1 // loop_header_branch
      %21 = sbr.rel (%p19) target = $region8
    $region5: #{forward.1} parent=1 // loop_body
      %s23 = ssub.s32 %s18, 1
      %s24 = ssub.s32 %s18, 2
      %s25 = sadd.s32 %s18, 1
      %s26 = ssub.s32 %s18, %s25
      %p27 = scmp.eq.s32.totalorder %s26, 0
      %s29 = sadd.s32 %s28, 1
      %s30 = scalar_select %p27, %s28, %s29
      %p33 = pneg %p27
      %p34 = scmp.eq.s32.totalorder %s18, 1
      %p35 = por %p33, %p34
      %p36 = scmp.ne.s32.totalorder %s28, %s31
      %p37 = scmp.eq.s32.totalorder %s18, 0
      %p38 = por %p36, %p37
      %p39 = scmp.ne.s32.totalorder %s28, %s31
      %p40 = scmp.eq.s32.totalorder %s23, 1
      %p41 = por %p39, %p40
      %p42 = scmp.ne.s32.totalorder %s31, %s32
      %p43 = scmp.eq.s32.totalorder %s23, 0
      %p44 = por %p42, %p43
      %p45 = scmp.ne.s32.totalorder %s31, %s32
      %p46 = scmp.eq.s32.totalorder %s24, 1
      %p47 = por %p45, %p46
      %p49 = scmp.ne.s32.totalorder %s32, %s48
      %p50 = scmp.eq.s32.totalorder %s24, 0
      %p51 = por %p49, %p50
      %s53 = sadd.s32 %s52, 1
      %p56 = scmp.eq.s32.totalorder %s18, 1
      %p57 = scmp.ne.s32.totalorder %s52, %s54
      %p58 = scmp.eq.s32.totalorder %s18, 0
      %p59 = por %p57, %p58
      %p60 = scmp.ne.s32.totalorder %s52, %s54
      %p61 = scmp.eq.s32.totalorder %s23, 1
      %p62 = por %p60, %p61
      %p63 = scmp.ne.s32.totalorder %s54, %s55
      %p64 = scmp.eq.s32.totalorder %s23, 0
      %p65 = por %p63, %p64
      %p66 = scmp.ne.s32.totalorder %s54, %s55
      %p67 = scmp.eq.s32.totalorder %s24, 1
      %p68 = por %p66, %p67
      %p70 = scmp.ne.s32.totalorder %s55, %s69
      %p71 = scmp.eq.s32.totalorder %s24, 0
      %p72 = por %p70, %p71
      %s74 = sadd.s32 %s73, 1
      %p77 = scmp.eq.s32.totalorder %s18, 1
      %p78 = scmp.ne.s32.totalorder %s73, %s75
      %p79 = scmp.eq.s32.totalorder %s18, 0
      %p80 = por %p78, %p79
      %p81 = scmp.ne.s32.totalorder %s73, %s75
      %p82 = scmp.eq.s32.totalorder %s23, 1
      %p83 = por %p81, %p82
      %p84 = scmp.ne.s32.totalorder %s75, %s76
      %p85 = scmp.eq.s32.totalorder %s23, 0
      %p86 = por %p84, %p85
      %p87 = scmp.ne.s32.totalorder %s75, %s76
      %p88 = scmp.eq.s32.totalorder %s24, 1
      %p89 = por %p87, %p88
      %p91 = scmp.ne.s32.totalorder %s76, %s90
      %p92 = scmp.eq.s32.totalorder %s24, 0
      %p93 = por %p91, %p92
      %s95 = sadd.s32 %s94, 1
      %p98 = scmp.eq.s32.totalorder %s18, 1
      %p99 = scmp.ne.s32.totalorder %s94, %s96
      %p100 = scmp.eq.s32.totalorder %s18, 0
      %p101 = por %p99, %p100
      %p102 = scmp.ne.s32.totalorder %s94, %s96
      %p103 = scmp.eq.s32.totalorder %s23, 1
      %p104 = por %p102, %p103
      %p105 = scmp.ne.s32.totalorder %s96, %s97
      %p106 = scmp.eq.s32.totalorder %s23, 0
      %p107 = por %p105, %p106
      %p108 = scmp.ne.s32.totalorder %s96, %s97
      %p109 = scmp.eq.s32.totalorder %s24, 1
      %p110 = por %p108, %p109
      %p112 = scmp.ne.s32.totalorder %s97, %s111
      %p113 = scmp.eq.s32.totalorder %s24, 0
      %p114 = por %p112, %p113
      %s116 = sadd.s32 %s115, 1
      %p119 = scmp.eq.s32.totalorder %s18, 1
      %p120 = scmp.ne.s32.totalorder %s115, %s117
      %p121 = scmp.eq.s32.totalorder %s18, 0
      %p122 = por %p120, %p121
      %p123 = scmp.ne.s32.totalorder %s115, %s117
      %p124 = scmp.eq.s32.totalorder %s23, 1
      %p125 = por %p123, %p124
      %p126 = scmp.ne.s32.totalorder %s117, %s118
      %p127 = scmp.eq.s32.totalorder %s23, 0
      %p128 = por %p126, %p127
      %p129 = scmp.ne.s32.totalorder %s117, %s118
      %p130 = scmp.eq.s32.totalorder %s24, 1
      %p131 = por %p129, %p130
      %p133 = scmp.ne.s32.totalorder %s118, %s132
      %p134 = scmp.eq.s32.totalorder %s24, 0
      %p135 = por %p133, %p134
      %s137 = sadd.s32 %s136, 1
      %p140 = scmp.eq.s32.totalorder %s18, 1
      %p141 = scmp.ne.s32.totalorder %s136, %s138
      %p142 = scmp.eq.s32.totalorder %s18, 0
      %p143 = por %p141, %p142
      %p144 = scmp.ne.s32.totalorder %s136, %s138
      %p145 = scmp.eq.s32.totalorder %s23, 1
      %p146 = por %p144, %p145
      %p147 = scmp.ne.s32.totalorder %s138, %s139
      %p148 = scmp.eq.s32.totalorder %s23, 0
      %p149 = por %p147, %p148
      %p150 = scmp.ne.s32.totalorder %s138, %s139
      %p151 = scmp.eq.s32.totalorder %s24, 1
      %p152 = por %p150, %p151
      %p154 = scmp.ne.s32.totalorder %s139, %s153
      %p155 = scmp.eq.s32.totalorder %s24, 0
      %p156 = por %p154, %p155
      %s158 = sadd.s32 %s157, 1
      %p161 = scmp.eq.s32.totalorder %s18, 1
      %p162 = scmp.ne.s32.totalorder %s157, %s159
      %p163 = scmp.eq.s32.totalorder %s18, 0
      %p164 = por %p162, %p163
      %p165 = scmp.ne.s32.totalorder %s157, %s159
      %p166 = scmp.eq.s32.totalorder %s23, 1
      %p167 = por %p165, %p166
      %p168 = scmp.ne.s32.totalorder %s159, %s160
      %p169 = scmp.eq.s32.totalorder %s23, 0
      %p170 = por %p168, %p169
      %p171 = scmp.ne.s32.totalorder %s159, %s160
      %p172 = scmp.eq.s32.totalorder %s24, 1
      %p173 = por %p171, %p172
      %p175 = scmp.ne.s32.totalorder %s160, %s174
      %p176 = scmp.eq.s32.totalorder %s24, 0
      %p177 = por %p175, %p176
      %s179 = sadd.s32 %s178, 1
      %p182 = scmp.eq.s32.totalorder %s18, 1
      %p183 = scmp.ne.s32.totalorder %s178, %s180
      %p184 = scmp.eq.s32.totalorder %s18, 0
      %p185 = por %p183, %p184
      %p186 = scmp.ne.s32.totalorder %s178, %s180
      %p187 = scmp.eq.s32.totalorder %s23, 1
      %p188 = por %p186, %p187
      %p189 = scmp.ne.s32.totalorder %s180, %s181
      %p190 = scmp.eq.s32.totalorder %s23, 0
      %p191 = por %p189, %p190
      %p192 = scmp.ne.s32.totalorder %s180, %s181
      %p193 = scmp.eq.s32.totalorder %s24, 1
      %p194 = por %p192, %p193
      %p196 = scmp.ne.s32.totalorder %s181, %s195
      %p197 = scmp.eq.s32.totalorder %s24, 0
      %p198 = por %p196, %p197
      %s200 = sadd.s32 %s199, 1
      %p203 = scmp.eq.s32.totalorder %s18, 1
      %p204 = scmp.ne.s32.totalorder %s199, %s201
      %p205 = scmp.eq.s32.totalorder %s18, 0
      %p206 = por %p204, %p205
      %p207 = scmp.ne.s32.totalorder %s199, %s201
      %p208 = scmp.eq.s32.totalorder %s23, 1
      %p209 = por %p207, %p208
      %p210 = scmp.ne.s32.totalorder %s201, %s202
      %p211 = scmp.eq.s32.totalorder %s23, 0
      %p212 = por %p210, %p211
      %p213 = scmp.ne.s32.totalorder %s201, %s202
      %p214 = scmp.eq.s32.totalorder %s24, 1
      %p215 = por %p213, %p214
      %p217 = scmp.ne.s32.totalorder %s202, %s216
      %p218 = scmp.eq.s32.totalorder %s24, 0
      %p219 = por %p217, %p218
      %s220 = ssub.s32 %s18, %s25
      %p221 = scmp.eq.s32.totalorder %s220, 0
      %s223 = sadd.s32 %s222, 1
      %s224 = scalar_select %p221, %s222, %s223
      %p227 = pneg %p221
      %p228 = scmp.eq.s32.totalorder %s18, 1
      %p229 = por %p227, %p228
      %p230 = scmp.ne.s32.totalorder %s222, %s225
      %p231 = scmp.eq.s32.totalorder %s18, 0
      %p232 = por %p230, %p231
      %p233 = scmp.ne.s32.totalorder %s222, %s225
      %p234 = scmp.eq.s32.totalorder %s23, 1
      %p235 = por %p233, %p234
      %p236 = scmp.ne.s32.totalorder %s225, %s226
      %p237 = scmp.eq.s32.totalorder %s23, 0
      %p238 = por %p236, %p237
      %p239 = scmp.ne.s32.totalorder %s225, %s226
      %p240 = scmp.eq.s32.totalorder %s24, 1
      %p241 = por %p239, %p240
      %p243 = scmp.ne.s32.totalorder %s226, %s242
      %p244 = scmp.eq.s32.totalorder %s24, 0
      %p245 = por %p243, %p244
      %p246 = scmp.le.s32.totalorder 1, %s18
      %p247 = scmp.lt.s32.totalorder %s18, 3
      %p248 = pnand %p246, %p247
      %p249 = pneg %p248
      // Predicated region
      $region9: #{forward.1} parent=5 // pred_check
        _
      $region10: #{forward.1} parent=5 // pred_check_branch
        %251 = sbr.rel (%p248) target = $region12
      $region11: #{forward.1} parent=5 // pred_region
        %s252 = ssub.s32 %s18, 1
        // Predicated region
        $region13: #{forward.1} parent=11 // pred_check
          %p253 = pneg %p65
        $region14: #{forward.1} parent=11 // pred_check_branch
          %255 = sbr.rel (%p253) target = $region16
        $region15: #{forward.1} parent=11 // pred_region
          _
        $region16: #{forward.1} parent=11 // pred_fallthru
          _
        // Predicated region
        $region17: #{forward.1} parent=11 // pred_check
          %p256 = pneg %p86
        $region18: #{forward.1} parent=11 // pred_check_branch
          %258 = sbr.rel (%p256) target = $region20
        $region19: #{forward.1} parent=11 // pred_region
          _
        $region20: #{forward.1} parent=11 // pred_fallthru
          _
        // Predicated region
        $region21: #{forward.1} parent=11 // pred_check
          %p259 = pneg %p107
        $region22: #{forward.1} parent=11 // pred_check_branch
          %261 = sbr.rel (%p259) target = $region24
        $region23: #{forward.1} parent=11 // pred_region
          _
        $region24: #{forward.1} parent=11 // pred_fallthru
          _
        // Predicated region
        $region25: #{forward.1} parent=11 // pred_check
          %p262 = pneg %p128
        $region26: #{forward.1} parent=11 // pred_check_branch
          %264 = sbr.rel (%p262) target = $region28
        $region27: #{forward.1} parent=11 // pred_region
          _
        $region28: #{forward.1} parent=11 // pred_fallthru
          _
        // Predicated region
        $region29: #{forward.1} parent=11 // pred_check
          %p265 = pneg %p149
        $region30: #{forward.1} parent=11 // pred_check_branch
          %267 = sbr.rel (%p265) target = $region32
        $region31: #{forward.1} parent=11 // pred_region
          _
        $region32: #{forward.1} parent=11 // pred_fallthru
          _
        // Predicated region
        $region33: #{forward.1} parent=11 // pred_check
          %p268 = pneg %p170
        $region34: #{forward.1} parent=11 // pred_check_branch
          %270 = sbr.rel (%p268) target = $region36
        $region35: #{forward.1} parent=11 // pred_region
          _
        $region36: #{forward.1} parent=11 // pred_fallthru
          _
        // Predicated region
        $region37: #{forward.1} parent=11 // pred_check
          %p271 = pneg %p191
        $region38: #{forward.1} parent=11 // pred_check_branch
          %273 = sbr.rel (%p271) target = $region40
        $region39: #{forward.1} parent=11 // pred_region
          _
        $region40: #{forward.1} parent=11 // pred_fallthru
          _
        // Predicated region
        $region41: #{forward.1} parent=11 // pred_check
          %p274 = pneg %p212
        $region42: #{forward.1} parent=11 // pred_check_branch
          %276 = sbr.rel (%p274) target = $region44
        $region43: #{forward.1} parent=11 // pred_region
          _
        $region44: #{forward.1} parent=11 // pred_fallthru
          _
      $region12: #{forward.1} parent=5 // pred_fallthru
        _
      %p277 = scmp.lt.s32.totalorder %s18, 2
      // Predicated region
      $region45: #{forward.1} parent=5 // pred_check
        %p278 = pneg %p277
      $region46: #{forward.1} parent=5 // pred_check_branch
        %280 = sbr.rel (%p278) target = $region48
      $region47: #{forward.1} parent=5 // pred_region
        // Predicated region
        $region49: #{forward.1} parent=47 // pred_check
          %p281 = pneg %p38
        $region50: #{forward.1} parent=47 // pred_check_branch
          %283 = sbr.rel (%p281) target = $region52
        $region51: #{forward.1} parent=47 // pred_region
          %p284 = scmp.lt.s32.totalorder %s18, 1
          %s285 = scalar_select %p284, %s18, 1
          %s286 = smul.addr %s285, 48
          %s287 = smul.addr %s286, 8
          %s288 = scalar_lea.vmem %s0, %s287
        $region52: #{forward.1} parent=47 // pred_fallthru
          _
      $region48: #{forward.1} parent=5 // pred_fallthru
        _
      %p289 = scmp.le.s32.totalorder 1, %s18
      %p290 = scmp.lt.s32.totalorder %s18, 3
      %p291 = pnand %p289, %p290
      %p292 = pneg %p291
      // Predicated region
      $region53: #{forward.1} parent=5 // pred_check
        _
      $region54: #{forward.1} parent=5 // pred_check_branch
        %294 = sbr.rel (%p291) target = $region56
      $region55: #{forward.1} parent=5 // pred_region
        %s295 = ssub.s32 %s18, 1
        %p296 = scmp.lt.s32.totalorder %s23, 1
        %s297 = scalar_select %p296, %s23, 1
        %s298 = smul.addr %s297, 48
        %s299 = smul.addr %s298, 8
        %s300 = scalar_lea.vmem %s0, %s299
        %p301 = pneg %p44
        %p302 = pneg %p41
        %p303 = pneg %p65
        %p304 = pneg %p62
        %p305 = pneg %p86
        %p306 = pneg %p83
        %p307 = pneg %p107
        %p308 = pneg %p104
        %p309 = pneg %p128
        %p310 = pneg %p125
        %p311 = pneg %p149
        %p312 = pneg %p146
        %p313 = pneg %p170
        %p314 = pneg %p167
        %p315 = pneg %p191
        %p316 = pneg %p188
        %p317 = pneg %p212
        %p318 = pneg %p209
        %p319 = pneg %p238
        %p320 = pneg %p235
        %s321 = sand.u32 %s225, 1
        %s322 = scalar_lea.sflag [#allocation3], %s321
        %s323 = sand.u32 %s225, 1
        %s324 = smul.addr %s323, 8
        %s325 = scalar_lea.vmem [#allocation2], %s324
        %p326 = scmp.lt.s32.totalorder %s23, 1
        %s327 = scalar_select %p326, %s23, 1
        %s328 = smul.addr %s327, 48
        %s329 = smul.addr %s328, 8
        %s330 = scalar_lea.vmem %s0, %s329
        %v331 = vld [vmem:[%s8] sm:$0x1]
        %v332 = vld [vmem:[%s8 + $0x1] sm:$0x1]
        %v333 = vld [vmem:[%s8 + $0x2] sm:$0x1]
        %v334 = vld [vmem:[%s8 + $0x3] sm:$0x1]
        %v335 = vld [vmem:[%s8 + $0x4] sm:$0x1]
        %v336 = vld [vmem:[%s330] sm:$0xff]
        %v337 = vld [vmem:[%s330 + $0x8] sm:$0xff]
        %v338 = vld [vmem:[%s330 + $0x10] sm:$0xff]
        %v339 = vld [vmem:[%s330 + $0x18] sm:$0xff]
        %v340 = vld [vmem:[%s330 + $0x20] sm:$0xff]
        %v341 = vld [vmem:[%s330 + $0x28] sm:$0xff]
        %v342 = vld [vmem:[%s330 + $0x30] sm:$0xff]
        %v343 = vld [vmem:[%s330 + $0x38] sm:$0xff]
        %v344 = vld [vmem:[%s330 + $0x40] sm:$0xff]
        %v345 = vld [vmem:[%s330 + $0x48] sm:$0xff]
        %v346 = vld [vmem:[%s330 + $0x50] sm:$0xff]
        %v347 = vld [vmem:[%s330 + $0x58] sm:$0xff]
        %v348 = vld [vmem:[%s330 + $0x60] sm:$0xff]
        %v349 = vld [vmem:[%s330 + $0x68] sm:$0xff]
        %v350 = vld [vmem:[%s330 + $0x70] sm:$0xff]
        %v351 = vld [vmem:[%s330 + $0x78] sm:$0xff]
        %v352 = vld [vmem:[%s330 + $0x80] sm:$0xff]
        %v353 = vld [vmem:[%s330 + $0x88] sm:$0xff]
        %v354 = vld [vmem:[%s330 + $0x90] sm:$0xff]
        %v355 = vld [vmem:[%s330 + $0x98] sm:$0xff]
        %v356 = vld [vmem:[%s330 + $0xa0] sm:$0xff]
        %v357 = vld [vmem:[%s330 + $0xa8] sm:$0xff]
        %v358 = vld [vmem:[%s330 + $0xb0] sm:$0xff]
        %v359 = vld [vmem:[%s330 + $0xb8] sm:$0xff]
        %v360 = vld [vmem:[%s330 + $0xc0] sm:$0xff]
        %v361 = vld [vmem:[%s330 + $0xc8] sm:$0xff]
        %v362 = vld [vmem:[%s330 + $0xd0] sm:$0xff]
        %v363 = vld [vmem:[%s330 + $0xd8] sm:$0xff]
        %v364 = vld [vmem:[%s330 + $0xe0] sm:$0xff]
        %v365 = vld [vmem:[%s330 + $0xe8] sm:$0xff]
        %v366 = vld [vmem:[%s330 + $0xf0] sm:$0xff]
        %v367 = vld [vmem:[%s330 + $0xf8] sm:$0xff]
        %v368 = vld [vmem:[%s330 + $0x100] sm:$0xff]
        %v369 = vld [vmem:[%s330 + $0x108] sm:$0xff]
        %v370 = vld [vmem:[%s330 + $0x110] sm:$0xff]
        %v371 = vld [vmem:[%s330 + $0x118] sm:$0xff]
        %v372 = vld [vmem:[%s330 + $0x120] sm:$0xff]
        %v373 = vld [vmem:[%s330 + $0x128] sm:$0xff]
        %v374 = vld [vmem:[%s330 + $0x130] sm:$0xff]
        %v375 = vld [vmem:[%s330 + $0x138] sm:$0xff]
        %v376 = vld [vmem:[%s330 + $0x140] sm:$0xff]
        %v377 = vld [vmem:[%s330 + $0x148] sm:$0xff]
        %v378 = vld [vmem:[%s330 + $0x150] sm:$0xff]
        %v379 = vld [vmem:[%s330 + $0x158] sm:$0xff]
        %v380 = vld [vmem:[%s330 + $0x160] sm:$0xff]
        %v381 = vld [vmem:[%s330 + $0x168] sm:$0xff]
        %v382 = vld [vmem:[%s330 + $0x170] sm:$0xff]
        %v383 = vld [vmem:[%s330 + $0x178] sm:$0xff]
        %v384 = vld [vmem:[%s1] sm:$0xff]
        %v385 = vld [vmem:[%s1 + $0x8] sm:$0xff]
        %v386 = vld [vmem:[%s1 + $0x10] sm:$0xff]
        %v387 = vld [vmem:[%s1 + $0x18] sm:$0xff]
        %v388 = vld [vmem:[%s1 + $0x20] sm:$0xff]
        %v389 = vld [vmem:[%s1 + $0x28] sm:$0xff]
        %v390 = vld [vmem:[%s1 + $0x30] sm:$0xff]
        %v391 = vld [vmem:[%s1 + $0x38] sm:$0xff]
        %v392 = vld [vmem:[%s1 + $0x40] sm:$0xff]
        %v393 = vld [vmem:[%s1 + $0x48] sm:$0xff]
        %v394 = vld [vmem:[%s1 + $0x50] sm:$0xff]
        %v395 = vld [vmem:[%s1 + $0x58] sm:$0xff]
        %v396 = vld [vmem:[%s1 + $0x60] sm:$0xff]
        %v397 = vld [vmem:[%s1 + $0x68] sm:$0xff]
        %v398 = vld [vmem:[%s1 + $0x70] sm:$0xff]
        %v399 = vld [vmem:[%s1 + $0x78] sm:$0xff]
        %v400 = vld [vmem:[%s1 + $0x80] sm:$0xff]
        %v401 = vld [vmem:[%s1 + $0x88] sm:$0xff]
        %v402 = vld [vmem:[%s1 + $0x90] sm:$0xff]
        %v403 = vld [vmem:[%s1 + $0x98] sm:$0xff]
        %v404 = vld [vmem:[%s1 + $0xa0] sm:$0xff]
        %v405 = vld [vmem:[%s1 + $0xa8] sm:$0xff]
        %v406 = vld [vmem:[%s1 + $0xb0] sm:$0xff]
        %v407 = vld [vmem:[%s1 + $0xb8] sm:$0xff]
        %v408 = vld [vmem:[%s1 + $0xc0] sm:$0xff]
        %v409 = vld [vmem:[%s1 + $0xc8] sm:$0xff]
        %v410 = vld [vmem:[%s1 + $0xd0] sm:$0xff]
        %v411 = vld [vmem:[%s1 + $0xd8] sm:$0xff]
        %v412 = vld [vmem:[%s1 + $0xe0] sm:$0xff]
        %v413 = vld [vmem:[%s1 + $0xe8] sm:$0xff]
        %v414 = vld [vmem:[%s1 + $0xf0] sm:$0xff]
        %v415 = vld [vmem:[%s1 + $0xf8] sm:$0xff]
        %v416 = vld [vmem:[%s1 + $0x100] sm:$0xff]
        %v417 = vld [vmem:[%s1 + $0x108] sm:$0xff]
        %v418 = vld [vmem:[%s1 + $0x110] sm:$0xf]
        %v419 = vld [vmem:[%s1 + $0x118] sm:$0xf]
        %vm420 = vcmask 97280
        %v422 = vsel %vm420, %v337, 0
        %v425 = vsel %vm420, %v339, 0
        %v428 = vsel %vm420, %v341, 0
        %v431 = vsel %vm420, %v343, 0
        %v434 = vsel %vm420, %v345, 0
        %v437 = vsel %vm420, %v347, 0
        %v440 = vsel %vm420, %v349, 0
        %v443 = vsel %vm420, %v351, 0
        %v446 = vsel %vm420, %v353, 0
        %v449 = vsel %vm420, %v355, 0
        %v452 = vsel %vm420, %v357, 0
        %v455 = vsel %vm420, %v359, 0
        %v458 = vsel %vm420, %v361, 0
        %v461 = vsel %vm420, %v363, 0
        %v464 = vsel %vm420, %v365, 0
        %v467 = vsel %vm420, %v367, 0
        %v470 = vsel %vm420, %v369, 0
        %v473 = vsel %vm420, %v371, 0
        %v476 = vsel %vm420, %v373, 0
        %v479 = vsel %vm420, %v375, 0
        %v482 = vsel %vm420, %v377, 0
        %v485 = vsel %vm420, %v379, 0
        %v488 = vsel %vm420, %v381, 0
        %v491 = vsel %vm420, %v383, 0
        %vm493 = vcmask 1043456
        %v495 = vsel %vm493, %v418, 0
        %v498 = vsel %vm493, %v419, 0
        %500 = vmatpush.msra.mxu0 %v414
        %501 = vmatpush.msra.mxu0 %v412
        %502 = vmatpush.msra.mxu0 %v410
        %503 = vmatpush.msra.mxu0 %v408
        %504 = vmatpush.msra.mxu0 %v406
        %505 = vmatpush.msra.mxu0 %v404
        %506 = vmatpush.msra.mxu0 %v402
        %507 = vmatpush.msra.mxu0 %v400
        %508 = vmatpush.msra.mxu0 %v398
        %509 = vmatpush.msra.mxu0 %v396
        %510 = vmatpush.msra.mxu0 %v394
        %511 = vmatpush.msra.mxu0 %v392
        %512 = vmatpush.msra.mxu0 %v390
        %513 = vmatpush.msra.mxu0 %v388
        %514 = vmatpush.msra.mxu0 %v386
        %515 = vmatpush.msra.mxu0 %v384
        %516 = vmatmul.f32.gmra.mxu0 %v336
        %v517 = vpop.f32.mrf.mxu0
        %v518 = vadd.f32 0.0, %v517
        %519 = vmatmul.f32.gmra.mxu0 %v338
        %v520 = vpop.f32.mrf.mxu0
        %v521 = vadd.f32 0.0, %v520
        %522 = vmatmul.f32.gmra.mxu0 %v340
        %v523 = vpop.f32.mrf.mxu0
        %v524 = vadd.f32 0.0, %v523
        %525 = vmatmul.f32.gmra.mxu0 %v342
        %v526 = vpop.f32.mrf.mxu0
        %v527 = vadd.f32 0.0, %v526
        %528 = vmatmul.f32.gmra.mxu0 %v344
        %v529 = vpop.f32.mrf.mxu0
        %v530 = vadd.f32 0.0, %v529
        %531 = vmatmul.f32.gmra.mxu0 %v346
        %v532 = vpop.f32.mrf.mxu0
        %v533 = vadd.f32 0.0, %v532
        %534 = vmatmul.f32.gmra.mxu0 %v348
        %v535 = vpop.f32.mrf.mxu0
        %v536 = vadd.f32 0.0, %v535
        %537 = vmatmul.f32.gmra.mxu0 %v350
        %v538 = vpop.f32.mrf.mxu0
        %v539 = vadd.f32 0.0, %v538
        %540 = vmatmul.f32.gmra.mxu0 %v352
        %v541 = vpop.f32.mrf.mxu0
        %v542 = vadd.f32 0.0, %v541
        %543 = vmatmul.f32.gmra.mxu0 %v354
        %v544 = vpop.f32.mrf.mxu0
        %v545 = vadd.f32 0.0, %v544
        %546 = vmatmul.f32.gmra.mxu0 %v356
        %v547 = vpop.f32.mrf.mxu0
        %v548 = vadd.f32 0.0, %v547
        %549 = vmatmul.f32.gmra.mxu0 %v358
        %v550 = vpop.f32.mrf.mxu0
        %v551 = vadd.f32 0.0, %v550
        %552 = vmatmul.f32.gmra.mxu0 %v360
        %v553 = vpop.f32.mrf.mxu0
        %v554 = vadd.f32 0.0, %v553
        %555 = vmatmul.f32.gmra.mxu0 %v362
        %v556 = vpop.f32.mrf.mxu0
        %v557 = vadd.f32 0.0, %v556
        %558 = vmatmul.f32.gmra.mxu0 %v364
        %v559 = vpop.f32.mrf.mxu0
        %v560 = vadd.f32 0.0, %v559
        %561 = vmatmul.f32.gmra.mxu0 %v366
        %v562 = vpop.f32.mrf.mxu0
        %v563 = vadd.f32 0.0, %v562
        %564 = vmatmul.f32.gmra.mxu0 %v368
        %v565 = vpop.f32.mrf.mxu0
        %v566 = vadd.f32 0.0, %v565
        %567 = vmatmul.f32.gmra.mxu0 %v370
        %v568 = vpop.f32.mrf.mxu0
        %v569 = vadd.f32 0.0, %v568
        %570 = vmatmul.f32.gmra.mxu0 %v372
        %v571 = vpop.f32.mrf.mxu0
        %v572 = vadd.f32 0.0, %v571
        %573 = vmatmul.f32.gmra.mxu0 %v374
        %v574 = vpop.f32.mrf.mxu0
        %v575 = vadd.f32 0.0, %v574
        %576 = vmatmul.f32.gmra.mxu0 %v376
        %v577 = vpop.f32.mrf.mxu0
        %v578 = vadd.f32 0.0, %v577
        %579 = vmatmul.f32.gmra.mxu0 %v378
        %v580 = vpop.f32.mrf.mxu0
        %v581 = vadd.f32 0.0, %v580
        %582 = vmatmul.f32.gmra.mxu0 %v380
        %v583 = vpop.f32.mrf.mxu0
        %v584 = vadd.f32 0.0, %v583
        %585 = vmatmul.f32.gmra.mxu0 %v382
        %v586 = vpop.f32.mrf.mxu0
        %v587 = vadd.f32 0.0, %v586
        %588 = vdwg.mxu0
        %589 = vmatpush.msra.mxu0 0.0
        %590 = vmatpush.msra.mxu0 0.0
        %591 = vmatpush.msra.mxu0 0.0
        %592 = vmatpush.msra.mxu0 0.0
        %593 = vmatpush.msra.mxu0 0.0
        %594 = vmatpush.msra.mxu0 0.0
        %595 = vmatpush.msra.mxu0 0.0
        %596 = vmatpush.msra.mxu0 0.0
        %597 = vmatpush.msra.mxu0 0.0
        %598 = vmatpush.msra.mxu0 0.0
        %599 = vmatpush.msra.mxu0 0.0
        %600 = vmatpush.msra.mxu0 0.0
        %601 = vmatpush.msra.mxu0 0.0
        %602 = vmatpush.msra.mxu0 0.0
        %603 = vmatpush.msra.mxu0 %v495
        %604 = vmatpush.msra.mxu0 %v416
        %605 = vmatmul.f32.gmra.mxu0 %v422
        %v606 = vpop.f32.mrf.mxu0
        %v607 = vadd.f32 %v518, %v606
        %608 = vmatmul.f32.gmra.mxu0 %v425
        %v609 = vpop.f32.mrf.mxu0
        %v610 = vadd.f32 %v521, %v609
        %611 = vmatmul.f32.gmra.mxu0 %v428
        %v612 = vpop.f32.mrf.mxu0
        %v613 = vadd.f32 %v524, %v612
        %614 = vmatmul.f32.gmra.mxu0 %v431
        %v615 = vpop.f32.mrf.mxu0
        %v616 = vadd.f32 %v527, %v615
        %617 = vmatmul.f32.gmra.mxu0 %v434
        %v618 = vpop.f32.mrf.mxu0
        %v619 = vadd.f32 %v530, %v618
        %620 = vmatmul.f32.gmra.mxu0 %v437
        %v621 = vpop.f32.mrf.mxu0
        %v622 = vadd.f32 %v533, %v621
        %623 = vmatmul.f32.gmra.mxu0 %v440
        %v624 = vpop.f32.mrf.mxu0
        %v625 = vadd.f32 %v536, %v624
        %626 = vmatmul.f32.gmra.mxu0 %v443
        %v627 = vpop.f32.mrf.mxu0
        %v628 = vadd.f32 %v539, %v627
        %629 = vmatmul.f32.gmra.mxu0 %v446
        %v630 = vpop.f32.mrf.mxu0
        %v631 = vadd.f32 %v542, %v630
        %632 = vmatmul.f32.gmra.mxu0 %v449
        %v633 = vpop.f32.mrf.mxu0
        %v634 = vadd.f32 %v545, %v633
        %635 = vmatmul.f32.gmra.mxu0 %v452
        %v636 = vpop.f32.mrf.mxu0
        %v637 = vadd.f32 %v548, %v636
        %638 = vmatmul.f32.gmra.mxu0 %v455
        %v639 = vpop.f32.mrf.mxu0
        %v640 = vadd.f32 %v551, %v639
        %641 = vmatmul.f32.gmra.mxu0 %v458
        %v642 = vpop.f32.mrf.mxu0
        %v643 = vadd.f32 %v554, %v642
        %644 = vmatmul.f32.gmra.mxu0 %v461
        %v645 = vpop.f32.mrf.mxu0
        %v646 = vadd.f32 %v557, %v645
        %647 = vmatmul.f32.gmra.mxu0 %v464
        %v648 = vpop.f32.mrf.mxu0
        %v649 = vadd.f32 %v560, %v648
        %650 = vmatmul.f32.gmra.mxu0 %v467
        %v651 = vpop.f32.mrf.mxu0
        %v652 = vadd.f32 %v563, %v651
        %653 = vmatmul.f32.gmra.mxu0 %v470
        %v654 = vpop.f32.mrf.mxu0
        %v655 = vadd.f32 %v566, %v654
        %656 = vmatmul.f32.gmra.mxu0 %v473
        %v657 = vpop.f32.mrf.mxu0
        %v658 = vadd.f32 %v569, %v657
        %659 = vmatmul.f32.gmra.mxu0 %v476
        %v660 = vpop.f32.mrf.mxu0
        %v661 = vadd.f32 %v572, %v660
        %662 = vmatmul.f32.gmra.mxu0 %v479
        %v663 = vpop.f32.mrf.mxu0
        %v664 = vadd.f32 %v575, %v663
        %665 = vmatmul.f32.gmra.mxu0 %v482
        %v666 = vpop.f32.mrf.mxu0
        %v667 = vadd.f32 %v578, %v666
        %668 = vmatmul.f32.gmra.mxu0 %v485
        %v669 = vpop.f32.mrf.mxu0
        %v670 = vadd.f32 %v581, %v669
        %671 = vmatmul.f32.gmra.mxu0 %v488
        %v672 = vpop.f32.mrf.mxu0
        %v673 = vadd.f32 %v584, %v672
        %674 = vmatmul.f32.gmra.mxu0 %v491
        %v675 = vpop.f32.mrf.mxu0
        %v676 = vadd.f32 %v587, %v675
        %677 = vdwg.mxu0
        %678 = vmatpush.msra.mxu0 %v415
        %679 = vmatpush.msra.mxu0 %v413
        %680 = vmatpush.msra.mxu0 %v411
        %681 = vmatpush.msra.mxu0 %v409
        %682 = vmatpush.msra.mxu0 %v407
        %683 = vmatpush.msra.mxu0 %v405
        %684 = vmatpush.msra.mxu0 %v403
        %685 = vmatpush.msra.mxu0 %v401
        %686 = vmatpush.msra.mxu0 %v399
        %687 = vmatpush.msra.mxu0 %v397
        %688 = vmatpush.msra.mxu0 %v395
        %689 = vmatpush.msra.mxu0 %v393
        %690 = vmatpush.msra.mxu0 %v391
        %691 = vmatpush.msra.mxu0 %v389
        %692 = vmatpush.msra.mxu0 %v387
        %693 = vmatpush.msra.mxu0 %v385
        %694 = vmatmul.f32.gmra.mxu0 %v336
        %v695 = vpop.f32.mrf.mxu0
        %v696 = vadd.f32 0.0, %v695
        %697 = vmatmul.f32.gmra.mxu0 %v338
        %v698 = vpop.f32.mrf.mxu0
        %v699 = vadd.f32 0.0, %v698
        %700 = vmatmul.f32.gmra.mxu0 %v340
        %v701 = vpop.f32.mrf.mxu0
        %v702 = vadd.f32 0.0, %v701
        %703 = vmatmul.f32.gmra.mxu0 %v342
        %v704 = vpop.f32.mrf.mxu0
        %v705 = vadd.f32 0.0, %v704
        %706 = vmatmul.f32.gmra.mxu0 %v344
        %v707 = vpop.f32.mrf.mxu0
        %v708 = vadd.f32 0.0, %v707
        %709 = vmatmul.f32.gmra.mxu0 %v346
        %v710 = vpop.f32.mrf.mxu0
        %v711 = vadd.f32 0.0, %v710
        %712 = vmatmul.f32.gmra.mxu0 %v348
        %v713 = vpop.f32.mrf.mxu0
        %v714 = vadd.f32 0.0, %v713
        %715 = vmatmul.f32.gmra.mxu0 %v350
        %v716 = vpop.f32.mrf.mxu0
        %v717 = vadd.f32 0.0, %v716
        %718 = vmatmul.f32.gmra.mxu0 %v352
        %v719 = vpop.f32.mrf.mxu0
        %v720 = vadd.f32 0.0, %v719
        %721 = vmatmul.f32.gmra.mxu0 %v354
        %v722 = vpop.f32.mrf.mxu0
        %v723 = vadd.f32 0.0, %v722
        %724 = vmatmul.f32.gmra.mxu0 %v356
        %v725 = vpop.f32.mrf.mxu0
        %v726 = vadd.f32 0.0, %v725
        %727 = vmatmul.f32.gmra.mxu0 %v358
        %v728 = vpop.f32.mrf.mxu0
        %v729 = vadd.f32 0.0, %v728
        %730 = vmatmul.f32.gmra.mxu0 %v360
        %v731 = vpop.f32.mrf.mxu0
        %v732 = vadd.f32 0.0, %v731
        %733 = vmatmul.f32.gmra.mxu0 %v362
        %v734 = vpop.f32.mrf.mxu0
        %v735 = vadd.f32 0.0, %v734
        %736 = vmatmul.f32.gmra.mxu0 %v364
        %v737 = vpop.f32.mrf.mxu0
        %v738 = vadd.f32 0.0, %v737
        %739 = vmatmul.f32.gmra.mxu0 %v366
        %v740 = vpop.f32.mrf.mxu0
        %v741 = vadd.f32 0.0, %v740
        %742 = vmatmul.f32.gmra.mxu0 %v368
        %v743 = vpop.f32.mrf.mxu0
        %v744 = vadd.f32 0.0, %v743
        %745 = vmatmul.f32.gmra.mxu0 %v370
        %v746 = vpop.f32.mrf.mxu0
        %v747 = vadd.f32 0.0, %v746
        %748 = vmatmul.f32.gmra.mxu0 %v372
        %v749 = vpop.f32.mrf.mxu0
        %v750 = vadd.f32 0.0, %v749
        %751 = vmatmul.f32.gmra.mxu0 %v374
        %v752 = vpop.f32.mrf.mxu0
        %v753 = vadd.f32 0.0, %v752
        %754 = vmatmul.f32.gmra.mxu0 %v376
        %v755 = vpop.f32.mrf.mxu0
        %v756 = vadd.f32 0.0, %v755
        %757 = vmatmul.f32.gmra.mxu0 %v378
        %v758 = vpop.f32.mrf.mxu0
        %v759 = vadd.f32 0.0, %v758
        %760 = vmatmul.f32.gmra.mxu0 %v380
        %v761 = vpop.f32.mrf.mxu0
        %v762 = vadd.f32 0.0, %v761
        %763 = vmatmul.f32.gmra.mxu0 %v382
        %v764 = vpop.f32.mrf.mxu0
        %v765 = vadd.f32 0.0, %v764
        %766 = vdwg.mxu0
        %767 = vmatpush.msra.mxu0 0.0
        %768 = vmatpush.msra.mxu0 0.0
        %769 = vmatpush.msra.mxu0 0.0
        %770 = vmatpush.msra.mxu0 0.0
        %771 = vmatpush.msra.mxu0 0.0
        %772 = vmatpush.msra.mxu0 0.0
        %773 = vmatpush.msra.mxu0 0.0
        %774 = vmatpush.msra.mxu0 0.0
        %775 = vmatpush.msra.mxu0 0.0
        %776 = vmatpush.msra.mxu0 0.0
        %777 = vmatpush.msra.mxu0 0.0
        %778 = vmatpush.msra.mxu0 0.0
        %779 = vmatpush.msra.mxu0 0.0
        %780 = vmatpush.msra.mxu0 0.0
        %781 = vmatpush.msra.mxu0 %v498
        %782 = vmatpush.msra.mxu0 %v417
        %783 = vmatmul.f32.gmra.mxu0 %v422
        %v784 = vpop.f32.mrf.mxu0
        %v785 = vadd.f32 %v696, %v784
        %786 = vmatmul.f32.gmra.mxu0 %v425
        %v787 = vpop.f32.mrf.mxu0
        %v788 = vadd.f32 %v699, %v787
        %789 = vmatmul.f32.gmra.mxu0 %v428
        %v790 = vpop.f32.mrf.mxu0
        %v791 = vadd.f32 %v702, %v790
        %792 = vmatmul.f32.gmra.mxu0 %v431
        %v793 = vpop.f32.mrf.mxu0
        %v794 = vadd.f32 %v705, %v793
        %795 = vmatmul.f32.gmra.mxu0 %v434
        %v796 = vpop.f32.mrf.mxu0
        %v797 = vadd.f32 %v708, %v796
        %798 = vmatmul.f32.gmra.mxu0 %v437
        %v799 = vpop.f32.mrf.mxu0
        %v800 = vadd.f32 %v711, %v799
        %801 = vmatmul.f32.gmra.mxu0 %v440
        %v802 = vpop.f32.mrf.mxu0
        %v803 = vadd.f32 %v714, %v802
        %804 = vmatmul.f32.gmra.mxu0 %v443
        %v805 = vpop.f32.mrf.mxu0
        %v806 = vadd.f32 %v717, %v805
        %807 = vmatmul.f32.gmra.mxu0 %v446
        %v808 = vpop.f32.mrf.mxu0
        %v809 = vadd.f32 %v720, %v808
        %810 = vmatmul.f32.gmra.mxu0 %v449
        %v811 = vpop.f32.mrf.mxu0
        %v812 = vadd.f32 %v723, %v811
        %813 = vmatmul.f32.gmra.mxu0 %v452
        %v814 = vpop.f32.mrf.mxu0
        %v815 = vadd.f32 %v726, %v814
        %816 = vmatmul.f32.gmra.mxu0 %v455
        %v817 = vpop.f32.mrf.mxu0
        %v818 = vadd.f32 %v729, %v817
        %819 = vmatmul.f32.gmra.mxu0 %v458
        %v820 = vpop.f32.mrf.mxu0
        %v821 = vadd.f32 %v732, %v820
        %822 = vmatmul.f32.gmra.mxu0 %v461
        %v823 = vpop.f32.mrf.mxu0
        %v824 = vadd.f32 %v735, %v823
        %825 = vmatmul.f32.gmra.mxu0 %v464
        %v826 = vpop.f32.mrf.mxu0
        %v827 = vadd.f32 %v738, %v826
        %828 = vmatmul.f32.gmra.mxu0 %v467
        %v829 = vpop.f32.mrf.mxu0
        %v830 = vadd.f32 %v741, %v829
        %831 = vmatmul.f32.gmra.mxu0 %v470
        %v832 = vpop.f32.mrf.mxu0
        %v833 = vadd.f32 %v744, %v832
        %834 = vmatmul.f32.gmra.mxu0 %v473
        %v835 = vpop.f32.mrf.mxu0
        %v836 = vadd.f32 %v747, %v835
        %837 = vmatmul.f32.gmra.mxu0 %v476
        %v838 = vpop.f32.mrf.mxu0
        %v839 = vadd.f32 %v750, %v838
        %840 = vmatmul.f32.gmra.mxu0 %v479
        %v841 = vpop.f32.mrf.mxu0
        %v842 = vadd.f32 %v753, %v841
        %843 = vmatmul.f32.gmra.mxu0 %v482
        %v844 = vpop.f32.mrf.mxu0
        %v845 = vadd.f32 %v756, %v844
        %846 = vmatmul.f32.gmra.mxu0 %v485
        %v847 = vpop.f32.mrf.mxu0
        %v848 = vadd.f32 %v759, %v847
        %849 = vmatmul.f32.gmra.mxu0 %v488
        %v850 = vpop.f32.mrf.mxu0
        %v851 = vadd.f32 %v762, %v850
        %852 = vmatmul.f32.gmra.mxu0 %v491
        %v853 = vpop.f32.mrf.mxu0
        %v854 = vadd.f32 %v765, %v853
        %855 = vdwg.mxu0
        %v856 = vmax.f32 %v607, %v643
        %v857 = vmax.f32 %v785, %v821
        %v858 = vmax.f32 %v610, %v646
        %v859 = vmax.f32 %v788, %v824
        %v860 = vmax.f32 %v613, %v649
        %v861 = vmax.f32 %v791, %v827
        %v862 = vmax.f32 %v616, %v652
        %v863 = vmax.f32 %v794, %v830
        %v864 = vmax.f32 %v619, %v655
        %v865 = vmax.f32 %v797, %v833
        %v866 = vmax.f32 %v622, %v658
        %v867 = vmax.f32 %v800, %v836
        %v868 = vmax.f32 %v625, %v661
        %v869 = vmax.f32 %v803, %v839
        %v870 = vmax.f32 %v628, %v664
        %v871 = vmax.f32 %v806, %v842
        %v872 = vmax.f32 %v631, %v667
        %v873 = vmax.f32 %v809, %v845
        %v874 = vmax.f32 %v634, %v670
        %v875 = vmax.f32 %v812, %v848
        %v876 = vmax.f32 %v637, %v673
        %v877 = vmax.f32 %v815, %v851
        %v878 = vmax.f32 %v640, %v676
        %v879 = vmax.f32 %v818, %v854
        %v880 = vld [vmem:[%s2] sm:$0xff]
        %v881 = vld [vmem:[%s2 + $0x8] sm:$0xff]
        %v882 = vld [vmem:[%s2 + $0x10] sm:$0xff]
        %v883 = vld [vmem:[%s2 + $0x18] sm:$0xff]
        %v884 = vld [vmem:[%s2 + $0x20] sm:$0xff]
        %v885 = vld [vmem:[%s2 + $0x28] sm:$0xff]
        %v886 = vld [vmem:[%s2 + $0x30] sm:$0xff]
        %v887 = vld [vmem:[%s2 + $0x38] sm:$0xff]
        %v888 = vld [vmem:[%s2 + $0x40] sm:$0xff]
        %v889 = vld [vmem:[%s2 + $0x48] sm:$0xff]
        %v890 = vld [vmem:[%s2 + $0x50] sm:$0xff]
        %v891 = vld [vmem:[%s2 + $0x58] sm:$0xff]
        %v892 = vld [vmem:[%s2 + $0x60] sm:$0xff]
        %v893 = vld [vmem:[%s2 + $0x68] sm:$0xff]
        %v894 = vld [vmem:[%s2 + $0x70] sm:$0xff]
        %v895 = vld [vmem:[%s2 + $0x78] sm:$0xff]
        %v896 = vld [vmem:[%s2 + $0x80] sm:$0xff]
        %v897 = vld [vmem:[%s2 + $0x88] sm:$0xff]
        %vm898 = vcmask 130048
        %v900 = vsel %vm898, %v857, 0
        %v903 = vsel %vm898, %v859, 0
        %v906 = vsel %vm898, %v861, 0
        %v909 = vsel %vm898, %v863, 0
        %v912 = vsel %vm898, %v865, 0
        %v915 = vsel %vm898, %v867, 0
        %v918 = vsel %vm898, %v869, 0
        %v921 = vsel %vm898, %v871, 0
        %v924 = vsel %vm898, %v873, 0
        %v927 = vsel %vm898, %v875, 0
        %v930 = vsel %vm898, %v877, 0
        %v933 = vsel %vm898, %v879, 0
        %935 = vmatpush.msra.mxu0 %v895
        %936 = vmatpush.msra.mxu0 %v894
        %937 = vmatpush.msra.mxu0 %v893
        %938 = vmatpush.msra.mxu0 %v892
        %939 = vmatpush.msra.mxu0 %v891
        %940 = vmatpush.msra.mxu0 %v890
        %941 = vmatpush.msra.mxu0 %v889
        %942 = vmatpush.msra.mxu0 %v888
        %943 = vmatpush.msra.mxu0 %v887
        %944 = vmatpush.msra.mxu0 %v886
        %945 = vmatpush.msra.mxu0 %v885
        %946 = vmatpush.msra.mxu0 %v884
        %947 = vmatpush.msra.mxu0 %v883
        %948 = vmatpush.msra.mxu0 %v882
        %949 = vmatpush.msra.mxu0 %v881
        %950 = vmatpush.msra.mxu0 %v880
        %951 = vmatmul.f32.gmra.mxu0 %v856
        %v952 = vpop.f32.mrf.mxu0
        %v953 = vadd.f32 0.0, %v952
        %954 = vmatmul.f32.gmra.mxu0 %v858
        %v955 = vpop.f32.mrf.mxu0
        %v956 = vadd.f32 0.0, %v955
        %957 = vmatmul.f32.gmra.mxu0 %v860
        %v958 = vpop.f32.mrf.mxu0
        %v959 = vadd.f32 0.0, %v958
        %960 = vmatmul.f32.gmra.mxu0 %v862
        %v961 = vpop.f32.mrf.mxu0
        %v962 = vadd.f32 0.0, %v961
        %963 = vmatmul.f32.gmra.mxu0 %v864
        %v964 = vpop.f32.mrf.mxu0
        %v965 = vadd.f32 0.0, %v964
        %966 = vmatmul.f32.gmra.mxu0 %v866
        %v967 = vpop.f32.mrf.mxu0
        %v968 = vadd.f32 0.0, %v967
        %969 = vmatmul.f32.gmra.mxu0 %v868
        %v970 = vpop.f32.mrf.mxu0
        %v971 = vadd.f32 0.0, %v970
        %972 = vmatmul.f32.gmra.mxu0 %v870
        %v973 = vpop.f32.mrf.mxu0
        %v974 = vadd.f32 0.0, %v973
        %975 = vmatmul.f32.gmra.mxu0 %v872
        %v976 = vpop.f32.mrf.mxu0
        %v977 = vadd.f32 0.0, %v976
        %978 = vmatmul.f32.gmra.mxu0 %v874
        %v979 = vpop.f32.mrf.mxu0
        %v980 = vadd.f32 0.0, %v979
        %981 = vmatmul.f32.gmra.mxu0 %v876
        %v982 = vpop.f32.mrf.mxu0
        %v983 = vadd.f32 0.0, %v982
        %984 = vmatmul.f32.gmra.mxu0 %v878
        %v985 = vpop.f32.mrf.mxu0
        %v986 = vadd.f32 0.0, %v985
        %987 = vdwg.mxu0
        %988 = vmatpush.msra.mxu0 0.0
        %989 = vmatpush.msra.mxu0 0.0
        %990 = vmatpush.msra.mxu0 0.0
        %991 = vmatpush.msra.mxu0 0.0
        %992 = vmatpush.msra.mxu0 0.0
        %993 = vmatpush.msra.mxu0 0.0
        %994 = vmatpush.msra.mxu0 0.0
        %995 = vmatpush.msra.mxu0 0.0
        %996 = vmatpush.msra.mxu0 0.0
        %997 = vmatpush.msra.mxu0 0.0
        %998 = vmatpush.msra.mxu0 0.0
        %999 = vmatpush.msra.mxu0 0.0
        %1000 = vmatpush.msra.mxu0 0.0
        %1001 = vmatpush.msra.mxu0 0.0
        %1002 = vmatpush.msra.mxu0 %v897
        %1003 = vmatpush.msra.mxu0 %v896
        %1004 = vmatmul.f32.gmra.mxu0 %v900
        %v1005 = vpop.f32.mrf.mxu0
        %v1006 = vadd.f32 %v953, %v1005
        %1007 = vmatmul.f32.gmra.mxu0 %v903
        %v1008 = vpop.f32.mrf.mxu0
        %v1009 = vadd.f32 %v956, %v1008
        %1010 = vmatmul.f32.gmra.mxu0 %v906
        %v1011 = vpop.f32.mrf.mxu0
        %v1012 = vadd.f32 %v959, %v1011
        %1013 = vmatmul.f32.gmra.mxu0 %v909
        %v1014 = vpop.f32.mrf.mxu0
        %v1015 = vadd.f32 %v962, %v1014
        %1016 = vmatmul.f32.gmra.mxu0 %v912
        %v1017 = vpop.f32.mrf.mxu0
        %v1018 = vadd.f32 %v965, %v1017
        %1019 = vmatmul.f32.gmra.mxu0 %v915
        %v1020 = vpop.f32.mrf.mxu0
        %v1021 = vadd.f32 %v968, %v1020
        %1022 = vmatmul.f32.gmra.mxu0 %v918
        %v1023 = vpop.f32.mrf.mxu0
        %v1024 = vadd.f32 %v971, %v1023
        %1025 = vmatmul.f32.gmra.mxu0 %v921
        %v1026 = vpop.f32.mrf.mxu0
        %v1027 = vadd.f32 %v974, %v1026
        %1028 = vmatmul.f32.gmra.mxu0 %v924
        %v1029 = vpop.f32.mrf.mxu0
        %v1030 = vadd.f32 %v977, %v1029
        %1031 = vmatmul.f32.gmra.mxu0 %v927
        %v1032 = vpop.f32.mrf.mxu0
        %v1033 = vadd.f32 %v980, %v1032
        %1034 = vmatmul.f32.gmra.mxu0 %v930
        %v1035 = vpop.f32.mrf.mxu0
        %v1036 = vadd.f32 %v983, %v1035
        %1037 = vmatmul.f32.gmra.mxu0 %v933
        %v1038 = vpop.f32.mrf.mxu0
        %v1039 = vadd.f32 %v986, %v1038
        %1040 = vdwg.mxu0
        %s1041 = scalar_lea.vmem %s2, 144
        %v1042 = vld [vmem:[%s1041] sm:$0xff]
        %v1043 = vld [vmem:[%s1041 + $0x8] sm:$0xff]
        %v1044 = vld [vmem:[%s1041 + $0x10] sm:$0xff]
        %v1045 = vld [vmem:[%s1041 + $0x18] sm:$0xff]
        %v1046 = vld [vmem:[%s1041 + $0x20] sm:$0xff]
        %v1047 = vld [vmem:[%s1041 + $0x28] sm:$0xff]
        %v1048 = vld [vmem:[%s1041 + $0x30] sm:$0xff]
        %v1049 = vld [vmem:[%s1041 + $0x38] sm:$0xff]
        %v1050 = vld [vmem:[%s1041 + $0x40] sm:$0xff]
        %v1051 = vld [vmem:[%s1041 + $0x48] sm:$0xff]
        %v1052 = vld [vmem:[%s1041 + $0x50] sm:$0xff]
        %v1053 = vld [vmem:[%s1041 + $0x58] sm:$0xff]
        %v1054 = vld [vmem:[%s1041 + $0x60] sm:$0xff]
        %v1055 = vld [vmem:[%s1041 + $0x68] sm:$0xff]
        %v1056 = vld [vmem:[%s1041 + $0x70] sm:$0xff]
        %v1057 = vld [vmem:[%s1041 + $0x78] sm:$0xff]
        %v1058 = vld [vmem:[%s1041 + $0x80] sm:$0xff]
        %v1059 = vld [vmem:[%s1041 + $0x88] sm:$0xff]
        %1060 = vmatpush.msra.mxu0 %v1057
        %1061 = vmatpush.msra.mxu0 %v1056
        %1062 = vmatpush.msra.mxu0 %v1055
        %1063 = vmatpush.msra.mxu0 %v1054
        %1064 = vmatpush.msra.mxu0 %v1053
        %1065 = vmatpush.msra.mxu0 %v1052
        %1066 = vmatpush.msra.mxu0 %v1051
        %1067 = vmatpush.msra.mxu0 %v1050
        %1068 = vmatpush.msra.mxu0 %v1049
        %1069 = vmatpush.msra.mxu0 %v1048
        %1070 = vmatpush.msra.mxu0 %v1047
        %1071 = vmatpush.msra.mxu0 %v1046
        %1072 = vmatpush.msra.mxu0 %v1045
        %1073 = vmatpush.msra.mxu0 %v1044
        %1074 = vmatpush.msra.mxu0 %v1043
        %1075 = vmatpush.msra.mxu0 %v1042
        %1076 = vmatmul.f32.gmra.mxu0 %v856
        %v1077 = vpop.f32.mrf.mxu0
        %v1078 = vadd.f32 0.0, %v1077
        %1079 = vmatmul.f32.gmra.mxu0 %v858
        %v1080 = vpop.f32.mrf.mxu0
        %v1081 = vadd.f32 0.0, %v1080
        %1082 = vmatmul.f32.gmra.mxu0 %v860
        %v1083 = vpop.f32.mrf.mxu0
        %v1084 = vadd.f32 0.0, %v1083
        %1085 = vmatmul.f32.gmra.mxu0 %v862
        %v1086 = vpop.f32.mrf.mxu0
        %v1087 = vadd.f32 0.0, %v1086
        %1088 = vmatmul.f32.gmra.mxu0 %v864
        %v1089 = vpop.f32.mrf.mxu0
        %v1090 = vadd.f32 0.0, %v1089
        %1091 = vmatmul.f32.gmra.mxu0 %v866
        %v1092 = vpop.f32.mrf.mxu0
        %v1093 = vadd.f32 0.0, %v1092
        %1094 = vmatmul.f32.gmra.mxu0 %v868
        %v1095 = vpop.f32.mrf.mxu0
        %v1096 = vadd.f32 0.0, %v1095
        %1097 = vmatmul.f32.gmra.mxu0 %v870
        %v1098 = vpop.f32.mrf.mxu0
        %v1099 = vadd.f32 0.0, %v1098
        %1100 = vmatmul.f32.gmra.mxu0 %v872
        %v1101 = vpop.f32.mrf.mxu0
        %v1102 = vadd.f32 0.0, %v1101
        %1103 = vmatmul.f32.gmra.mxu0 %v874
        %v1104 = vpop.f32.mrf.mxu0
        %v1105 = vadd.f32 0.0, %v1104
        %1106 = vmatmul.f32.gmra.mxu0 %v876
        %v1107 = vpop.f32.mrf.mxu0
        %v1108 = vadd.f32 0.0, %v1107
        %1109 = vmatmul.f32.gmra.mxu0 %v878
        %v1110 = vpop.f32.mrf.mxu0
        %v1111 = vadd.f32 0.0, %v1110
        %1112 = vdwg.mxu0
        %1113 = vmatpush.msra.mxu0 0.0
        %1114 = vmatpush.msra.mxu0 0.0
        %1115 = vmatpush.msra.mxu0 0.0
        %1116 = vmatpush.msra.mxu0 0.0
        %1117 = vmatpush.msra.mxu0 0.0
        %1118 = vmatpush.msra.mxu0 0.0
        %1119 = vmatpush.msra.mxu0 0.0
        %1120 = vmatpush.msra.mxu0 0.0
        %1121 = vmatpush.msra.mxu0 0.0
        %1122 = vmatpush.msra.mxu0 0.0
        %1123 = vmatpush.msra.mxu0 0.0
        %1124 = vmatpush.msra.mxu0 0.0
        %1125 = vmatpush.msra.mxu0 0.0
        %1126 = vmatpush.msra.mxu0 0.0
        %1127 = vmatpush.msra.mxu0 %v1059
        %1128 = vmatpush.msra.mxu0 %v1058
        %1129 = vmatmul.f32.gmra.mxu0 %v900
        %v1130 = vpop.f32.mrf.mxu0
        %v1131 = vadd.f32 %v1078, %v1130
        %1132 = vmatmul.f32.gmra.mxu0 %v903
        %v1133 = vpop.f32.mrf.mxu0
        %v1134 = vadd.f32 %v1081, %v1133
        %1135 = vmatmul.f32.gmra.mxu0 %v906
        %v1136 = vpop.f32.mrf.mxu0
        %v1137 = vadd.f32 %v1084, %v1136
        %1138 = vmatmul.f32.gmra.mxu0 %v909
        %v1139 = vpop.f32.mrf.mxu0
        %v1140 = vadd.f32 %v1087, %v1139
        %1141 = vmatmul.f32.gmra.mxu0 %v912
        %v1142 = vpop.f32.mrf.mxu0
        %v1143 = vadd.f32 %v1090, %v1142
        %1144 = vmatmul.f32.gmra.mxu0 %v915
        %v1145 = vpop.f32.mrf.mxu0
        %v1146 = vadd.f32 %v1093, %v1145
        %1147 = vmatmul.f32.gmra.mxu0 %v918
        %v1148 = vpop.f32.mrf.mxu0
        %v1149 = vadd.f32 %v1096, %v1148
        %1150 = vmatmul.f32.gmra.mxu0 %v921
        %v1151 = vpop.f32.mrf.mxu0
        %v1152 = vadd.f32 %v1099, %v1151
        %1153 = vmatmul.f32.gmra.mxu0 %v924
        %v1154 = vpop.f32.mrf.mxu0
        %v1155 = vadd.f32 %v1102, %v1154
        %1156 = vmatmul.f32.gmra.mxu0 %v927
        %v1157 = vpop.f32.mrf.mxu0
        %v1158 = vadd.f32 %v1105, %v1157
        %1159 = vmatmul.f32.gmra.mxu0 %v930
        %v1160 = vpop.f32.mrf.mxu0
        %v1161 = vadd.f32 %v1108, %v1160
        %1162 = vmatmul.f32.gmra.mxu0 %v933
        %v1163 = vpop.f32.mrf.mxu0
        %v1164 = vadd.f32 %v1111, %v1163
        %1165 = vdwg.mxu0
        %v1166 = vmax.f32 %v1006, %v1131
        %v1167 = vmax.f32 %v1009, %v1134
        %v1168 = vmax.f32 %v1012, %v1137
        %v1169 = vmax.f32 %v1015, %v1140
        %v1170 = vmax.f32 %v1018, %v1143
        %v1171 = vmax.f32 %v1021, %v1146
        %v1172 = vmax.f32 %v1024, %v1149
        %v1173 = vmax.f32 %v1027, %v1152
        %v1174 = vmax.f32 %v1030, %v1155
        %v1175 = vmax.f32 %v1033, %v1158
        %v1176 = vmax.f32 %v1036, %v1161
        %v1177 = vmax.f32 %v1039, %v1164
        %v1178 = vperm.slane %v331, 0
        %v1179 = vadd.f32 %v1166, %v1178
        %v1180 = vadd.f32 %v1167, %v1178
        %v1181 = vadd.f32 %v1168, %v1178
        %v1182 = vadd.f32 %v1169, %v1178
        %v1183 = vadd.f32 %v1170, %v1178
        %v1184 = vadd.f32 %v1171, %v1178
        %v1185 = vadd.f32 %v1172, %v1178
        %v1186 = vadd.f32 %v1173, %v1178
        %v1187 = vadd.f32 %v1174, %v1178
        %v1188 = vadd.f32 %v1175, %v1178
        %v1189 = vadd.f32 %v1176, %v1178
        %v1190 = vadd.f32 %v1177, %v1178
        %v1191 = vmax.f32 %v1179, 0.0
        %v1192 = vmax.f32 %v1180, 0.0
        %v1193 = vmax.f32 %v1181, 0.0
        %v1194 = vmax.f32 %v1182, 0.0
        %v1195 = vmax.f32 %v1183, 0.0
        %v1196 = vmax.f32 %v1184, 0.0
        %v1197 = vmax.f32 %v1185, 0.0
        %v1198 = vmax.f32 %v1186, 0.0
        %v1199 = vmax.f32 %v1187, 0.0
        %v1200 = vmax.f32 %v1188, 0.0
        %v1201 = vmax.f32 %v1189, 0.0
        %v1202 = vmax.f32 %v1190, 0.0
        %v1203 = vld [vmem:[%s3] sm:$0xff]
        %v1204 = vld [vmem:[%s3 + $0x8] sm:$0xff]
        %v1205 = vld [vmem:[%s3 + $0x10] sm:$0xff]
        %v1206 = vld [vmem:[%s3 + $0x18] sm:$0xff]
        %v1207 = vld [vmem:[%s3 + $0x20] sm:$0xff]
        %v1208 = vld [vmem:[%s3 + $0x28] sm:$0xff]
        %v1209 = vld [vmem:[%s3 + $0x30] sm:$0xff]
        %v1210 = vld [vmem:[%s3 + $0x38] sm:$0xff]
        %v1211 = vld [vmem:[%s3 + $0x40] sm:$0xff]
        %s1212 = scalar_lea.vmem %s3, 72
        %v1213 = vld [vmem:[%s1212] sm:$0xff]
        %v1214 = vld [vmem:[%s1212 + $0x8] sm:$0xff]
        %v1215 = vld [vmem:[%s1212 + $0x10] sm:$0xff]
        %v1216 = vld [vmem:[%s1212 + $0x18] sm:$0xff]
        %v1217 = vld [vmem:[%s1212 + $0x20] sm:$0xff]
        %v1218 = vld [vmem:[%s1212 + $0x28] sm:$0xff]
        %v1219 = vld [vmem:[%s1212 + $0x30] sm:$0xff]
        %v1220 = vld [vmem:[%s1212 + $0x38] sm:$0xff]
        %v1221 = vld [vmem:[%s1212 + $0x40] sm:$0xff]
        %vm1222 = vcmask 588800
        %v1224 = vsel %vm1222, %v1192, 0
        %v1227 = vsel %vm1222, %v1193, 0
        %v1230 = vsel %vm1222, %v1194, 0
        %v1233 = vsel %vm1222, %v1195, 0
        %v1236 = vsel %vm1222, %v1196, 0
        %v1239 = vsel %vm1222, %v1197, 0
        %v1242 = vsel %vm1222, %v1198, 0
        %v1245 = vsel %vm1222, %v1199, 0
        %1247 = vmatpush.msra.mxu0 0.0
        %1248 = vmatpush.msra.mxu0 0.0
        %1249 = vmatpush.msra.mxu0 0.0
        %1250 = vmatpush.msra.mxu0 0.0
        %1251 = vmatpush.msra.mxu0 0.0
        %1252 = vmatpush.msra.mxu0 0.0
        %1253 = vmatpush.msra.mxu0 0.0
        %1254 = vmatpush.msra.mxu0 %v1221
        %1255 = vmatpush.msra.mxu0 %v1220
        %1256 = vmatpush.msra.mxu0 %v1219
        %1257 = vmatpush.msra.mxu0 %v1218
        %1258 = vmatpush.msra.mxu0 %v1217
        %1259 = vmatpush.msra.mxu0 %v1216
        %1260 = vmatpush.msra.mxu0 %v1215
        %1261 = vmatpush.msra.mxu0 %v1214
        %1262 = vmatpush.msra.mxu0 %v1213
        %1263 = vmatmul.f32.gmra.mxu0 %v1224
        %v1264 = vpop.f32.mrf.mxu0
        %v1265 = vadd.f32 0.0, %v1264
        %1266 = vmatmul.f32.gmra.mxu0 %v1227
        %v1267 = vpop.f32.mrf.mxu0
        %v1268 = vadd.f32 0.0, %v1267
        %1269 = vmatmul.f32.gmra.mxu0 %v1230
        %v1270 = vpop.f32.mrf.mxu0
        %v1271 = vadd.f32 0.0, %v1270
        %1272 = vmatmul.f32.gmra.mxu0 %v1233
        %v1273 = vpop.f32.mrf.mxu0
        %v1274 = vadd.f32 0.0, %v1273
        %1275 = vmatmul.f32.gmra.mxu0 %v1236
        %v1276 = vpop.f32.mrf.mxu0
        %v1277 = vadd.f32 0.0, %v1276
        %1278 = vmatmul.f32.gmra.mxu0 %v1239
        %v1279 = vpop.f32.mrf.mxu0
        %v1280 = vadd.f32 0.0, %v1279
        %1281 = vmatmul.f32.gmra.mxu0 %v1242
        %v1282 = vpop.f32.mrf.mxu0
        %v1283 = vadd.f32 0.0, %v1282
        %1284 = vmatmul.f32.gmra.mxu0 %v1245
        %v1285 = vpop.f32.mrf.mxu0
        %v1286 = vadd.f32 0.0, %v1285
        %1287 = vdwg.mxu0
        %v1289 = vsel %vm1222, %v1191, 0
        %1291 = vmatpush.msra.mxu0 0.0
        %1292 = vmatpush.msra.mxu0 0.0
        %1293 = vmatpush.msra.mxu0 0.0
        %1294 = vmatpush.msra.mxu0 0.0
        %1295 = vmatpush.msra.mxu0 0.0
        %1296 = vmatpush.msra.mxu0 0.0
        %1297 = vmatpush.msra.mxu0 0.0
        %1298 = vmatpush.msra.mxu0 %v1211
        %1299 = vmatpush.msra.mxu0 %v1210
        %1300 = vmatpush.msra.mxu0 %v1209
        %1301 = vmatpush.msra.mxu0 %v1208
        %1302 = vmatpush.msra.mxu0 %v1207
        %1303 = vmatpush.msra.mxu0 %v1206
        %1304 = vmatpush.msra.mxu0 %v1205
        %1305 = vmatpush.msra.mxu0 %v1204
        %1306 = vmatpush.msra.mxu0 %v1203
        %1307 = vmatmul.f32.gmra.mxu0 %v1289
        %v1308 = vpop.f32.mrf.mxu0
        %v1309 = vadd.f32 %v1265, %v1308
        %1310 = vmatmul.f32.gmra.mxu0 %v1224
        %v1311 = vpop.f32.mrf.mxu0
        %v1312 = vadd.f32 %v1268, %v1311
        %1313 = vmatmul.f32.gmra.mxu0 %v1227
        %v1314 = vpop.f32.mrf.mxu0
        %v1315 = vadd.f32 %v1271, %v1314
        %1316 = vmatmul.f32.gmra.mxu0 %v1230
        %v1317 = vpop.f32.mrf.mxu0
        %v1318 = vadd.f32 %v1274, %v1317
        %1319 = vmatmul.f32.gmra.mxu0 %v1233
        %v1320 = vpop.f32.mrf.mxu0
        %v1321 = vadd.f32 %v1277, %v1320
        %1322 = vmatmul.f32.gmra.mxu0 %v1236
        %v1323 = vpop.f32.mrf.mxu0
        %v1324 = vadd.f32 %v1280, %v1323
        %1325 = vmatmul.f32.gmra.mxu0 %v1239
        %v1326 = vpop.f32.mrf.mxu0
        %v1327 = vadd.f32 %v1283, %v1326
        %1328 = vmatmul.f32.gmra.mxu0 %v1242
        %v1329 = vpop.f32.mrf.mxu0
        %v1330 = vadd.f32 %v1286, %v1329
        %1331 = vdwg.mxu0
        %s1332 = scalar_lea.vmem %s3, 144
        %v1333 = vld [vmem:[%s1332] sm:$0xff]
        %v1334 = vld [vmem:[%s1332 + $0x8] sm:$0xff]
        %v1335 = vld [vmem:[%s1332 + $0x10] sm:$0xff]
        %v1336 = vld [vmem:[%s1332 + $0x18] sm:$0xff]
        %v1337 = vld [vmem:[%s1332 + $0x20] sm:$0xff]
        %v1338 = vld [vmem:[%s1332 + $0x28] sm:$0xff]
        %v1339 = vld [vmem:[%s1332 + $0x30] sm:$0xff]
        %v1340 = vld [vmem:[%s1332 + $0x38] sm:$0xff]
        %v1341 = vld [vmem:[%s1332 + $0x40] sm:$0xff]
        %s1342 = scalar_lea.vmem %s3, 216
        %v1343 = vld [vmem:[%s1342] sm:$0xff]
        %v1344 = vld [vmem:[%s1342 + $0x8] sm:$0xff]
        %v1345 = vld [vmem:[%s1342 + $0x10] sm:$0xff]
        %v1346 = vld [vmem:[%s1342 + $0x18] sm:$0xff]
        %v1347 = vld [vmem:[%s1342 + $0x20] sm:$0xff]
        %v1348 = vld [vmem:[%s1342 + $0x28] sm:$0xff]
        %v1349 = vld [vmem:[%s1342 + $0x30] sm:$0xff]
        %v1350 = vld [vmem:[%s1342 + $0x38] sm:$0xff]
        %v1351 = vld [vmem:[%s1342 + $0x40] sm:$0xff]
        %v1353 = vsel %vm1222, %v1200, 0
        %v1356 = vsel %vm1222, %v1201, 0
        %1358 = vmatpush.msra.mxu0 0.0
        %1359 = vmatpush.msra.mxu0 0.0
        %1360 = vmatpush.msra.mxu0 0.0
        %1361 = vmatpush.msra.mxu0 0.0
        %1362 = vmatpush.msra.mxu0 0.0
        %1363 = vmatpush.msra.mxu0 0.0
        %1364 = vmatpush.msra.mxu0 0.0
        %1365 = vmatpush.msra.mxu0 %v1351
        %1366 = vmatpush.msra.mxu0 %v1350
        %1367 = vmatpush.msra.mxu0 %v1349
        %1368 = vmatpush.msra.mxu0 %v1348
        %1369 = vmatpush.msra.mxu0 %v1347
        %1370 = vmatpush.msra.mxu0 %v1346
        %1371 = vmatpush.msra.mxu0 %v1345
        %1372 = vmatpush.msra.mxu0 %v1344
        %1373 = vmatpush.msra.mxu0 %v1343
        %1374 = vmatmul.f32.gmra.mxu0 %v1230
        %v1375 = vpop.f32.mrf.mxu0
        %v1376 = vadd.f32 0.0, %v1375
        %1377 = vmatmul.f32.gmra.mxu0 %v1233
        %v1378 = vpop.f32.mrf.mxu0
        %v1379 = vadd.f32 0.0, %v1378
        %1380 = vmatmul.f32.gmra.mxu0 %v1236
        %v1381 = vpop.f32.mrf.mxu0
        %v1382 = vadd.f32 0.0, %v1381
        %1383 = vmatmul.f32.gmra.mxu0 %v1239
        %v1384 = vpop.f32.mrf.mxu0
        %v1385 = vadd.f32 0.0, %v1384
        %1386 = vmatmul.f32.gmra.mxu0 %v1242
        %v1387 = vpop.f32.mrf.mxu0
        %v1388 = vadd.f32 0.0, %v1387
        %1389 = vmatmul.f32.gmra.mxu0 %v1245
        %v1390 = vpop.f32.mrf.mxu0
        %v1391 = vadd.f32 0.0, %v1390
        %1392 = vmatmul.f32.gmra.mxu0 %v1353
        %v1393 = vpop.f32.mrf.mxu0
        %v1394 = vadd.f32 0.0, %v1393
        %1395 = vmatmul.f32.gmra.mxu0 %v1356
        %v1396 = vpop.f32.mrf.mxu0
        %v1397 = vadd.f32 0.0, %v1396
        %1398 = vdwg.mxu0
        %1399 = vmatpush.msra.mxu0 0.0
        %1400 = vmatpush.msra.mxu0 0.0
        %1401 = vmatpush.msra.mxu0 0.0
        %1402 = vmatpush.msra.mxu0 0.0
        %1403 = vmatpush.msra.mxu0 0.0
        %1404 = vmatpush.msra.mxu0 0.0
        %1405 = vmatpush.msra.mxu0 0.0
        %1406 = vmatpush.msra.mxu0 %v1341
        %1407 = vmatpush.msra.mxu0 %v1340
        %1408 = vmatpush.msra.mxu0 %v1339
        %1409 = vmatpush.msra.mxu0 %v1338
        %1410 = vmatpush.msra.mxu0 %v1337
        %1411 = vmatpush.msra.mxu0 %v1336
        %1412 = vmatpush.msra.mxu0 %v1335
        %1413 = vmatpush.msra.mxu0 %v1334
        %1414 = vmatpush.msra.mxu0 %v1333
        %1415 = vmatmul.f32.gmra.mxu0 %v1227
        %v1416 = vpop.f32.mrf.mxu0
        %v1417 = vadd.f32 %v1376, %v1416
        %1418 = vmatmul.f32.gmra.mxu0 %v1230
        %v1419 = vpop.f32.mrf.mxu0
        %v1420 = vadd.f32 %v1379, %v1419
        %1421 = vmatmul.f32.gmra.mxu0 %v1233
        %v1422 = vpop.f32.mrf.mxu0
        %v1423 = vadd.f32 %v1382, %v1422
        %1424 = vmatmul.f32.gmra.mxu0 %v1236
        %v1425 = vpop.f32.mrf.mxu0
        %v1426 = vadd.f32 %v1385, %v1425
        %1427 = vmatmul.f32.gmra.mxu0 %v1239
        %v1428 = vpop.f32.mrf.mxu0
        %v1429 = vadd.f32 %v1388, %v1428
        %1430 = vmatmul.f32.gmra.mxu0 %v1242
        %v1431 = vpop.f32.mrf.mxu0
        %v1432 = vadd.f32 %v1391, %v1431
        %1433 = vmatmul.f32.gmra.mxu0 %v1245
        %v1434 = vpop.f32.mrf.mxu0
        %v1435 = vadd.f32 %v1394, %v1434
        %1436 = vmatmul.f32.gmra.mxu0 %v1353
        %v1437 = vpop.f32.mrf.mxu0
        %v1438 = vadd.f32 %v1397, %v1437
        %1439 = vdwg.mxu0
        %v1440 = vadd.f32 %v1309, %v1417
        %v1441 = vadd.f32 %v1312, %v1420
        %v1442 = vadd.f32 %v1315, %v1423
        %v1443 = vadd.f32 %v1318, %v1426
        %v1444 = vadd.f32 %v1321, %v1429
        %v1445 = vadd.f32 %v1324, %v1432
        %v1446 = vadd.f32 %v1327, %v1435
        %v1447 = vadd.f32 %v1330, %v1438
        %s1448 = scalar_lea.vmem %s3, 288
        %v1449 = vld [vmem:[%s1448] sm:$0xff]
        %v1450 = vld [vmem:[%s1448 + $0x8] sm:$0xff]
        %v1451 = vld [vmem:[%s1448 + $0x10] sm:$0xff]
        %v1452 = vld [vmem:[%s1448 + $0x18] sm:$0xff]
        %v1453 = vld [vmem:[%s1448 + $0x20] sm:$0xff]
        %v1454 = vld [vmem:[%s1448 + $0x28] sm:$0xff]
        %v1455 = vld [vmem:[%s1448 + $0x30] sm:$0xff]
        %v1456 = vld [vmem:[%s1448 + $0x38] sm:$0xff]
        %v1457 = vld [vmem:[%s1448 + $0x40] sm:$0xff]
        %v1459 = vsel %vm1222, %v1202, 0
        %1461 = vmatpush.msra.mxu0 0.0
        %1462 = vmatpush.msra.mxu0 0.0
        %1463 = vmatpush.msra.mxu0 0.0
        %1464 = vmatpush.msra.mxu0 0.0
        %1465 = vmatpush.msra.mxu0 0.0
        %1466 = vmatpush.msra.mxu0 0.0
        %1467 = vmatpush.msra.mxu0 0.0
        %1468 = vmatpush.msra.mxu0 %v1457
        %1469 = vmatpush.msra.mxu0 %v1456
        %1470 = vmatpush.msra.mxu0 %v1455
        %1471 = vmatpush.msra.mxu0 %v1454
        %1472 = vmatpush.msra.mxu0 %v1453
        %1473 = vmatpush.msra.mxu0 %v1452
        %1474 = vmatpush.msra.mxu0 %v1451
        %1475 = vmatpush.msra.mxu0 %v1450
        %1476 = vmatpush.msra.mxu0 %v1449
        %1477 = vmatmul.f32.gmra.mxu0 %v1233
        %v1478 = vpop.f32.mrf.mxu0
        %v1479 = vadd.f32 0.0, %v1478
        %1480 = vmatmul.f32.gmra.mxu0 %v1236
        %v1481 = vpop.f32.mrf.mxu0
        %v1482 = vadd.f32 0.0, %v1481
        %1483 = vmatmul.f32.gmra.mxu0 %v1239
        %v1484 = vpop.f32.mrf.mxu0
        %v1485 = vadd.f32 0.0, %v1484
        %1486 = vmatmul.f32.gmra.mxu0 %v1242
        %v1487 = vpop.f32.mrf.mxu0
        %v1488 = vadd.f32 0.0, %v1487
        %1489 = vmatmul.f32.gmra.mxu0 %v1245
        %v1490 = vpop.f32.mrf.mxu0
        %v1491 = vadd.f32 0.0, %v1490
        %1492 = vmatmul.f32.gmra.mxu0 %v1353
        %v1493 = vpop.f32.mrf.mxu0
        %v1494 = vadd.f32 0.0, %v1493
        %1495 = vmatmul.f32.gmra.mxu0 %v1356
        %v1496 = vpop.f32.mrf.mxu0
        %v1497 = vadd.f32 0.0, %v1496
        %1498 = vmatmul.f32.gmra.mxu0 %v1459
        %v1499 = vpop.f32.mrf.mxu0
        %v1500 = vadd.f32 0.0, %v1499
        %1501 = vdwg.mxu0
        %v1502 = vadd.f32 %v1440, %v1479
        %v1503 = vadd.f32 %v1441, %v1482
        %v1504 = vadd.f32 %v1442, %v1485
        %v1505 = vadd.f32 %v1443, %v1488
        %v1506 = vadd.f32 %v1444, %v1491
        %v1507 = vadd.f32 %v1445, %v1494
        %v1508 = vadd.f32 %v1446, %v1497
        %v1509 = vadd.f32 %v1447, %v1500
        %v1510 = vld [vmem:[%s4] sm:$0xff]
        %v1511 = vld [vmem:[%s4 + $0x8] sm:$0xff]
        %v1512 = vld [vmem:[%s4 + $0x10] sm:$0xff]
        %v1513 = vld [vmem:[%s4 + $0x18] sm:$0xff]
        %v1514 = vld [vmem:[%s4 + $0x20] sm:$0xff]
        %v1515 = vld [vmem:[%s4 + $0x28] sm:$0xff]
        %v1516 = vld [vmem:[%s4 + $0x30] sm:$0xff]
        %v1517 = vld [vmem:[%s4 + $0x38] sm:$0xff]
        %v1518 = vld [vmem:[%s4 + $0x40] sm:$0xff]
        %v1519 = vld [vmem:[%s4 + $0x48] sm:$0xff]
        %v1520 = vld [vmem:[%s4 + $0x50] sm:$0xff]
        %v1521 = vld [vmem:[%s4 + $0x58] sm:$0xff]
        %v1522 = vld [vmem:[%s4 + $0x60] sm:$0xff]
        %v1523 = vld [vmem:[%s4 + $0x68] sm:$0xff]
        %v1524 = vld [vmem:[%s4 + $0x70] sm:$0xff]
        %v1525 = vld [vmem:[%s4 + $0x78] sm:$0xff]
        %1526 = vmatpush.msra.mxu0 %v1525
        %1527 = vmatpush.msra.mxu0 %v1524
        %1528 = vmatpush.msra.mxu0 %v1523
        %1529 = vmatpush.msra.mxu0 %v1522
        %1530 = vmatpush.msra.mxu0 %v1521
        %1531 = vmatpush.msra.mxu0 %v1520
        %1532 = vmatpush.msra.mxu0 %v1519
        %1533 = vmatpush.msra.mxu0 %v1518
        %1534 = vmatpush.msra.mxu0 %v1517
        %1535 = vmatpush.msra.mxu0 %v1516
        %1536 = vmatpush.msra.mxu0 %v1515
        %1537 = vmatpush.msra.mxu0 %v1514
        %1538 = vmatpush.msra.mxu0 %v1513
        %1539 = vmatpush.msra.mxu0 %v1512
        %1540 = vmatpush.msra.mxu0 %v1511
        %1541 = vmatpush.msra.mxu0 %v1510
        %1542 = vmatmul.f32.gmra.mxu0 %v1502
        %v1543 = vpop.f32.mrf.mxu0
        %v1544 = vadd.f32 0.0, %v1543
        %1545 = vmatmul.f32.gmra.mxu0 %v1503
        %v1546 = vpop.f32.mrf.mxu0
        %v1547 = vadd.f32 0.0, %v1546
        %1548 = vmatmul.f32.gmra.mxu0 %v1504
        %v1549 = vpop.f32.mrf.mxu0
        %v1550 = vadd.f32 0.0, %v1549
        %1551 = vmatmul.f32.gmra.mxu0 %v1505
        %v1552 = vpop.f32.mrf.mxu0
        %v1553 = vadd.f32 0.0, %v1552
        %1554 = vmatmul.f32.gmra.mxu0 %v1506
        %v1555 = vpop.f32.mrf.mxu0
        %v1556 = vadd.f32 0.0, %v1555
        %1557 = vmatmul.f32.gmra.mxu0 %v1507
        %v1558 = vpop.f32.mrf.mxu0
        %v1559 = vadd.f32 0.0, %v1558
        %1560 = vmatmul.f32.gmra.mxu0 %v1508
        %v1561 = vpop.f32.mrf.mxu0
        %v1562 = vadd.f32 0.0, %v1561
        %1563 = vmatmul.f32.gmra.mxu0 %v1509
        %v1564 = vpop.f32.mrf.mxu0
        %v1565 = vadd.f32 0.0, %v1564
        %1566 = vdwg.mxu0
        %s1567 = scalar_lea.vmem %s4, 128
        %v1568 = vld [vmem:[%s1567] sm:$0xff]
        %v1569 = vld [vmem:[%s1567 + $0x8] sm:$0xff]
        %v1570 = vld [vmem:[%s1567 + $0x10] sm:$0xff]
        %v1571 = vld [vmem:[%s1567 + $0x18] sm:$0xff]
        %v1572 = vld [vmem:[%s1567 + $0x20] sm:$0xff]
        %v1573 = vld [vmem:[%s1567 + $0x28] sm:$0xff]
        %v1574 = vld [vmem:[%s1567 + $0x30] sm:$0xff]
        %v1575 = vld [vmem:[%s1567 + $0x38] sm:$0xff]
        %v1576 = vld [vmem:[%s1567 + $0x40] sm:$0xff]
        %v1577 = vld [vmem:[%s1567 + $0x48] sm:$0xff]
        %v1578 = vld [vmem:[%s1567 + $0x50] sm:$0xff]
        %v1579 = vld [vmem:[%s1567 + $0x58] sm:$0xff]
        %v1580 = vld [vmem:[%s1567 + $0x60] sm:$0xff]
        %v1581 = vld [vmem:[%s1567 + $0x68] sm:$0xff]
        %v1582 = vld [vmem:[%s1567 + $0x70] sm:$0xff]
        %v1583 = vld [vmem:[%s1567 + $0x78] sm:$0xff]
        %1584 = vmatpush.msra.mxu0 %v1583
        %1585 = vmatpush.msra.mxu0 %v1582
        %1586 = vmatpush.msra.mxu0 %v1581
        %1587 = vmatpush.msra.mxu0 %v1580
        %1588 = vmatpush.msra.mxu0 %v1579
        %1589 = vmatpush.msra.mxu0 %v1578
        %1590 = vmatpush.msra.mxu0 %v1577
        %1591 = vmatpush.msra.mxu0 %v1576
        %1592 = vmatpush.msra.mxu0 %v1575
        %1593 = vmatpush.msra.mxu0 %v1574
        %1594 = vmatpush.msra.mxu0 %v1573
        %1595 = vmatpush.msra.mxu0 %v1572
        %1596 = vmatpush.msra.mxu0 %v1571
        %1597 = vmatpush.msra.mxu0 %v1570
        %1598 = vmatpush.msra.mxu0 %v1569
        %1599 = vmatpush.msra.mxu0 %v1568
        %1600 = vmatmul.f32.gmra.mxu0 %v1502
        %v1601 = vpop.f32.mrf.mxu0
        %v1602 = vadd.f32 0.0, %v1601
        %1603 = vmatmul.f32.gmra.mxu0 %v1503
        %v1604 = vpop.f32.mrf.mxu0
        %v1605 = vadd.f32 0.0, %v1604
        %1606 = vmatmul.f32.gmra.mxu0 %v1504
        %v1607 = vpop.f32.mrf.mxu0
        %v1608 = vadd.f32 0.0, %v1607
        %1609 = vmatmul.f32.gmra.mxu0 %v1505
        %v1610 = vpop.f32.mrf.mxu0
        %v1611 = vadd.f32 0.0, %v1610
        %1612 = vmatmul.f32.gmra.mxu0 %v1506
        %v1613 = vpop.f32.mrf.mxu0
        %v1614 = vadd.f32 0.0, %v1613
        %1615 = vmatmul.f32.gmra.mxu0 %v1507
        %v1616 = vpop.f32.mrf.mxu0
        %v1617 = vadd.f32 0.0, %v1616
        %1618 = vmatmul.f32.gmra.mxu0 %v1508
        %v1619 = vpop.f32.mrf.mxu0
        %v1620 = vadd.f32 0.0, %v1619
        %1621 = vmatmul.f32.gmra.mxu0 %v1509
        %v1622 = vpop.f32.mrf.mxu0
        %v1623 = vadd.f32 0.0, %v1622
        %1624 = vdwg.mxu0
        %v1625 = vmax.f32 %v1544, %v1602
        %v1626 = vmax.f32 %v1547, %v1605
        %v1627 = vmax.f32 %v1550, %v1608
        %v1628 = vmax.f32 %v1553, %v1611
        %v1629 = vmax.f32 %v1556, %v1614
        %v1630 = vmax.f32 %v1559, %v1617
        %v1631 = vmax.f32 %v1562, %v1620
        %v1632 = vmax.f32 %v1565, %v1623
        %v1633 = vmax.f32 %v1625, %v1626
        %v1634 = vperm.slane %v332, 0
        %v1635 = vadd.f32 %v1633, %v1634
        %v1636 = vmax.f32 %v1635, 0.0
        %v1637 = vmax.f32 %v1627, %v1628
        %v1638 = vadd.f32 %v1637, %v1634
        %v1639 = vmax.f32 %v1638, 0.0
        %v1640 = vmax.f32 %v1629, %v1630
        %v1641 = vadd.f32 %v1640, %v1634
        %v1642 = vmax.f32 %v1641, 0.0
        %v1643 = vmax.f32 %v1631, %v1632
        %v1644 = vadd.f32 %v1643, %v1634
        %v1645 = vmax.f32 %v1644, 0.0
        %v1646 = vld [vmem:[%s5] sm:$0xff]
        %v1647 = vld [vmem:[%s5 + $0x8] sm:$0xff]
        %v1648 = vld [vmem:[%s5 + $0x10] sm:$0xff]
        %v1649 = vld [vmem:[%s5 + $0x18] sm:$0xff]
        %v1650 = vld [vmem:[%s5 + $0x20] sm:$0xff]
        %v1651 = vld [vmem:[%s5 + $0x28] sm:$0xff]
        %v1652 = vld [vmem:[%s5 + $0x30] sm:$0xff]
        %v1653 = vld [vmem:[%s5 + $0x38] sm:$0xff]
        %s1654 = scalar_lea.vmem %s5, 64
        %v1655 = vld [vmem:[%s1654] sm:$0xff]
        %v1656 = vld [vmem:[%s1654 + $0x8] sm:$0xff]
        %v1657 = vld [vmem:[%s1654 + $0x10] sm:$0xff]
        %v1658 = vld [vmem:[%s1654 + $0x18] sm:$0xff]
        %v1659 = vld [vmem:[%s1654 + $0x20] sm:$0xff]
        %v1660 = vld [vmem:[%s1654 + $0x28] sm:$0xff]
        %v1661 = vld [vmem:[%s1654 + $0x30] sm:$0xff]
        %v1662 = vld [vmem:[%s1654 + $0x38] sm:$0xff]
        %vm1663 = vcmask 523264
        %v1665 = vsel %vm1663, %v1639, 0
        %1667 = vmatpush.msra.mxu0 0.0
        %1668 = vmatpush.msra.mxu0 0.0
        %1669 = vmatpush.msra.mxu0 0.0
        %1670 = vmatpush.msra.mxu0 0.0
        %1671 = vmatpush.msra.mxu0 0.0
        %1672 = vmatpush.msra.mxu0 0.0
        %1673 = vmatpush.msra.mxu0 0.0
        %1674 = vmatpush.msra.mxu0 0.0
        %1675 = vmatpush.msra.mxu0 %v1662
        %1676 = vmatpush.msra.mxu0 %v1661
        %1677 = vmatpush.msra.mxu0 %v1660
        %1678 = vmatpush.msra.mxu0 %v1659
        %1679 = vmatpush.msra.mxu0 %v1658
        %1680 = vmatpush.msra.mxu0 %v1657
        %1681 = vmatpush.msra.mxu0 %v1656
        %1682 = vmatpush.msra.mxu0 %v1655
        %1683 = vmatmul.f32.gmra.mxu0 %v1665
        %v1684 = vpop.f32.mrf.mxu0
        %v1685 = vadd.f32 0.0, %v1684
        %1686 = vdwg.mxu0
        %v1688 = vsel %vm1663, %v1636, 0
        %1690 = vmatpush.msra.mxu0 0.0
        %1691 = vmatpush.msra.mxu0 0.0
        %1692 = vmatpush.msra.mxu0 0.0
        %1693 = vmatpush.msra.mxu0 0.0
        %1694 = vmatpush.msra.mxu0 0.0
        %1695 = vmatpush.msra.mxu0 0.0
        %1696 = vmatpush.msra.mxu0 0.0
        %1697 = vmatpush.msra.mxu0 0.0
        %1698 = vmatpush.msra.mxu0 %v1653
        %1699 = vmatpush.msra.mxu0 %v1652
        %1700 = vmatpush.msra.mxu0 %v1651
        %1701 = vmatpush.msra.mxu0 %v1650
        %1702 = vmatpush.msra.mxu0 %v1649
        %1703 = vmatpush.msra.mxu0 %v1648
        %1704 = vmatpush.msra.mxu0 %v1647
        %1705 = vmatpush.msra.mxu0 %v1646
        %1706 = vmatmul.f32.gmra.mxu0 %v1688
        %v1707 = vpop.f32.mrf.mxu0
        %v1708 = vadd.f32 %v1685, %v1707
        %1709 = vdwg.mxu0
        %s1710 = scalar_lea.vmem %s5, 128
        %v1711 = vld [vmem:[%s1710] sm:$0xff]
        %v1712 = vld [vmem:[%s1710 + $0x8] sm:$0xff]
        %v1713 = vld [vmem:[%s1710 + $0x10] sm:$0xff]
        %v1714 = vld [vmem:[%s1710 + $0x18] sm:$0xff]
        %v1715 = vld [vmem:[%s1710 + $0x20] sm:$0xff]
        %v1716 = vld [vmem:[%s1710 + $0x28] sm:$0xff]
        %v1717 = vld [vmem:[%s1710 + $0x30] sm:$0xff]
        %v1718 = vld [vmem:[%s1710 + $0x38] sm:$0xff]
        %s1719 = scalar_lea.vmem %s5, 192
        %v1720 = vld [vmem:[%s1719] sm:$0xff]
        %v1721 = vld [vmem:[%s1719 + $0x8] sm:$0xff]
        %v1722 = vld [vmem:[%s1719 + $0x10] sm:$0xff]
        %v1723 = vld [vmem:[%s1719 + $0x18] sm:$0xff]
        %v1724 = vld [vmem:[%s1719 + $0x20] sm:$0xff]
        %v1725 = vld [vmem:[%s1719 + $0x28] sm:$0xff]
        %v1726 = vld [vmem:[%s1719 + $0x30] sm:$0xff]
        %v1727 = vld [vmem:[%s1719 + $0x38] sm:$0xff]
        %v1729 = vsel %vm1663, %v1645, 0
        %1731 = vmatpush.msra.mxu0 0.0
        %1732 = vmatpush.msra.mxu0 0.0
        %1733 = vmatpush.msra.mxu0 0.0
        %1734 = vmatpush.msra.mxu0 0.0
        %1735 = vmatpush.msra.mxu0 0.0
        %1736 = vmatpush.msra.mxu0 0.0
        %1737 = vmatpush.msra.mxu0 0.0
        %1738 = vmatpush.msra.mxu0 0.0
        %1739 = vmatpush.msra.mxu0 %v1727
        %1740 = vmatpush.msra.mxu0 %v1726
        %1741 = vmatpush.msra.mxu0 %v1725
        %1742 = vmatpush.msra.mxu0 %v1724
        %1743 = vmatpush.msra.mxu0 %v1723
        %1744 = vmatpush.msra.mxu0 %v1722
        %1745 = vmatpush.msra.mxu0 %v1721
        %1746 = vmatpush.msra.mxu0 %v1720
        %1747 = vmatmul.f32.gmra.mxu0 %v1729
        %v1748 = vpop.f32.mrf.mxu0
        %v1749 = vadd.f32 0.0, %v1748
        %1750 = vdwg.mxu0
        %v1752 = vsel %vm1663, %v1642, 0
        %1754 = vmatpush.msra.mxu0 0.0
        %1755 = vmatpush.msra.mxu0 0.0
        %1756 = vmatpush.msra.mxu0 0.0
        %1757 = vmatpush.msra.mxu0 0.0
        %1758 = vmatpush.msra.mxu0 0.0
        %1759 = vmatpush.msra.mxu0 0.0
        %1760 = vmatpush.msra.mxu0 0.0
        %1761 = vmatpush.msra.mxu0 0.0
        %1762 = vmatpush.msra.mxu0 %v1718
        %1763 = vmatpush.msra.mxu0 %v1717
        %1764 = vmatpush.msra.mxu0 %v1716
        %1765 = vmatpush.msra.mxu0 %v1715
        %1766 = vmatpush.msra.mxu0 %v1714
        %1767 = vmatpush.msra.mxu0 %v1713
        %1768 = vmatpush.msra.mxu0 %v1712
        %1769 = vmatpush.msra.mxu0 %v1711
        %1770 = vmatmul.f32.gmra.mxu0 %v1752
        %v1771 = vpop.f32.mrf.mxu0
        %v1772 = vadd.f32 %v1749, %v1771
        %1773 = vdwg.mxu0
        %v1774 = vadd.f32 %v1708, %v1772
        %v1775 = vperm.slane %v333, 0
        %v1776 = vadd.f32 %v1774, %v1775
        %v1777 = vmax.f32 %v1776, 0.0
        %v1778 = vld [vmem:[%s6] sm:$0xff]
        %v1779 = vld [vmem:[%s6 + $0x8] sm:$0xff]
        %v1780 = vld [vmem:[%s6 + $0x10] sm:$0xff]
        %v1781 = vld [vmem:[%s6 + $0x18] sm:$0xff]
        %v1782 = vld [vmem:[%s6 + $0x20] sm:$0xff]
        %v1783 = vld [vmem:[%s6 + $0x28] sm:$0xff]
        %v1784 = vld [vmem:[%s6 + $0x30] sm:$0xff]
        %v1785 = vld [vmem:[%s6 + $0x38] sm:$0xff]
        %v1786 = vld [vmem:[%s6 + $0x40] sm:$0xff]
        %v1787 = vld [vmem:[%s6 + $0x48] sm:$0xff]
        %v1788 = vld [vmem:[%s6 + $0x50] sm:$0xff]
        %v1789 = vld [vmem:[%s6 + $0x58] sm:$0xff]
        %v1790 = vld [vmem:[%s6 + $0x60] sm:$0xff]
        %v1791 = vld [vmem:[%s6 + $0x68] sm:$0xff]
        %v1792 = vld [vmem:[%s6 + $0x70] sm:$0xff]
        %v1793 = vperm.slane %v334, 0
        %vm1794 = vcmask 982016
        %v1796 = vsel %vm1794, %v1777, 0
        %1798 = vmatpush.msra.mxu0 0.0
        %1799 = vmatpush.msra.mxu0 %v1792
        %1800 = vmatpush.msra.mxu0 %v1791
        %1801 = vmatpush.msra.mxu0 %v1790
        %1802 = vmatpush.msra.mxu0 %v1789
        %1803 = vmatpush.msra.mxu0 %v1788
        %1804 = vmatpush.msra.mxu0 %v1787
        %1805 = vmatpush.msra.mxu0 %v1786
        %1806 = vmatpush.msra.mxu0 %v1785
        %1807 = vmatpush.msra.mxu0 %v1784
        %1808 = vmatpush.msra.mxu0 %v1783
        %1809 = vmatpush.msra.mxu0 %v1782
        %1810 = vmatpush.msra.mxu0 %v1781
        %1811 = vmatpush.msra.mxu0 %v1780
        %1812 = vmatpush.msra.mxu0 %v1779
        %1813 = vmatpush.msra.mxu0 %v1778
        %1814 = vmatmul.f32.gmra.mxu0 %v1796
        %v1815 = vpop.f32.mrf.mxu0
        %v1816 = vadd.f32 %v1793, %v1815
        %1817 = vdwg.mxu0
        %v1818 = vmax.f32 %v1816, 0.0
        %v1819 = vld [vmem:[%s7] sm:$0xff]
        %v1820 = vld [vmem:[%s7 + $0x8] sm:$0xff]
        %v1821 = vld [vmem:[%s7 + $0x10] sm:$0xff]
        %v1822 = vld [vmem:[%s7 + $0x18] sm:$0xff]
        %v1823 = vld [vmem:[%s7 + $0x20] sm:$0xff]
        %v1824 = vld [vmem:[%s7 + $0x28] sm:$0xff]
        %v1825 = vld [vmem:[%s7 + $0x30] sm:$0xff]
        %v1826 = vld [vmem:[%s7 + $0x38] sm:$0xff]
        %v1827 = vld [vmem:[%s7 + $0x40] sm:$0xff]
        %v1828 = vld [vmem:[%s7 + $0x48] sm:$0xff]
        %v1829 = vld [vmem:[%s7 + $0x50] sm:$0xf]
        %v1830 = vperm.slane %v335, 0
        %vm1831 = vcmask 687104
        %v1833 = vsel %vm1831, %v1818, 0
        %v1836 = vsel %vm493, %v1829, 0
        %1838 = vmatpush.msra.mxu0 0.0
        %1839 = vmatpush.msra.mxu0 0.0
        %1840 = vmatpush.msra.mxu0 0.0
        %1841 = vmatpush.msra.mxu0 0.0
        %1842 = vmatpush.msra.mxu0 0.0
        %1843 = vmatpush.msra.mxu0 %v1836
        %1844 = vmatpush.msra.mxu0 %v1828
        %1845 = vmatpush.msra.mxu0 %v1827
        %1846 = vmatpush.msra.mxu0 %v1826
        %1847 = vmatpush.msra.mxu0 %v1825
        %1848 = vmatpush.msra.mxu0 %v1824
        %1849 = vmatpush.msra.mxu0 %v1823
        %1850 = vmatpush.msra.mxu0 %v1822
        %1851 = vmatpush.msra.mxu0 %v1821
        %1852 = vmatpush.msra.mxu0 %v1820
        %1853 = vmatpush.msra.mxu0 %v1819
        %1854 = vmatmul.f32.gmra.mxu0 %v1833
        %v1855 = vpop.f32.mrf.mxu0
        %v1856 = vadd.f32 %v1830, %v1855
        %1857 = vdwg.mxu0
        %v1858 = vmax.f32 %v1856, 0.0
        %1859 = vst [vmem:[%s325] sm:$0xff] %v1858
        %s1860 = sand.u32 %s225, 1
        %s1861 = scalar_lea.sflag [#allocation3], %s1860
        %s1862 = sand.u32 %s225, 1
        %s1863 = smul.addr %s1862, 8
        %s1864 = scalar_lea.vmem [#allocation2], %s1863
        // Predicated region
        $region57: #{forward.1} parent=55 // pred_check
          %p1865 = pneg %p235
        $region58: #{forward.1} parent=55 // pred_check_branch
          %1867 = sbr.rel (%p1865) target = $region60
        $region59: #{forward.1} parent=55 // pred_region
          %1869 = vsyncadd %s1861, 0
          %s1870 = smul.addr %s23, 8
          %s1871 = scalar_lea.hbm %s9, %s1870
          %s1873 = sshll.u32 %s1864, 4
          %s1874 = int_to_ptr.vmem [resolvable:$true] %s1873
          %s1875 = sshll.u32 %s1871, 4
          %s1876 = int_to_ptr.hbm [resolvable:$true] %s1875
          %1878 = dma.vmem_to_hbm [thread:$0]  %s1874, 128, %s1876, %s1861
        $region60: #{forward.1} parent=55 // pred_fallthru
          _
      $region56: #{forward.1} parent=5 // pred_fallthru
        _
      %p1879 = scmp.le.s32.totalorder 2, %s18
      // Predicated region
      $region61: #{forward.1} parent=5 // pred_check
        %p1880 = pneg %p1879
      $region62: #{forward.1} parent=5 // pred_check_branch
        %1882 = sbr.rel (%p1880) target = $region64
      $region63: #{forward.1} parent=5 // pred_region
        %s1883 = ssub.s32 %s18, 2
        // Predicated region
        $region65: #{forward.1} parent=63 // pred_check
          %p1884 = pneg %p241
        $region66: #{forward.1} parent=63 // pred_check_branch
          %1886 = sbr.rel (%p1884) target = $region68
        $region67: #{forward.1} parent=63 // pred_region
          %s1887 = sand.u32 %s226, 1
          %s1888 = scalar_lea.sflag [#allocation3], %s1887
          %s1889 = sand.u32 %s226, 1
          %s1890 = smul.addr %s1889, 8
          %s1891 = scalar_lea.vmem [#allocation2], %s1890
          %1893 = dma.done %s1888, 128
        $region68: #{forward.1} parent=63 // pred_fallthru
          _
      $region64: #{forward.1} parent=5 // pred_fallthru
        _
    $region6: #{forward.1} parent=1 // loop_footer
      %s22 = sadd.s32 1, %s18
    $region7: #{forward.1} parent=1 // loop_footer_branch
      %17 = sbr.rel target = $region3
    $region8: #{forward.1} parent=1 // loop_exit
      _
    %1894 = vsyncpa [#allocation3], 1
    %s1895 = scalar_lea.sflag [#allocation3], 1
    %1896 = vsyncpa %s1895, 1

</llo_original>
